<compile_context>
chip_gen: v7x
topology: tpu7x:2x2x1
jax: 0.10.0
libtpu: 0.0.40
codegen_flags: <defaults>
</compile_context>

<pallas_src>
import jax
import jax.numpy as jnp
from jax.experimental import pallas as pl
from jax.experimental.pallas import tpu as pltpu

H_OUT, W_OUT = 480, 848
SLAB = 32  # uint8 sublane tile -> aligned, unmasked output stores


def seg_argmax_upsample_kernel(x_ref, w_ref, b_ref, p_colT_ref, o_ref):
    # x_ref:      (Cin, H, W)      f32  VMEM
    # w_ref:      (Cout*Cin,)      f32  SMEM   (flattened 1x1-conv weights)
    # b_ref:      (Cout,)          f32  SMEM
    # p_colT_ref: (W, W_OUT)       bf16 VMEM   (column one-hot selection, transposed)
    # o_ref:      (H_OUT, W_OUT)   u8   VMEM   (full output label map)
    cin, h, w = x_ref.shape
    cout = b_ref.shape[0]
    h_out, w_out = o_ref.shape
    rep = h_out // h                      # output rows per source row (exact)

    # ---- 1x1-conv head: load every input plane exactly once. ----
    planes = [x_ref[k] for k in range(cin)]

    def logit(c):
        acc = planes[0] * w_ref[c * cin + 0]
        for k in range(1, cin):
            acc = acc + planes[k] * w_ref[c * cin + k]
        return acc + b_ref[c]

    # ---- argmax over classes (strict-greater update == torch tie-breaking). ----
    best_val = logit(0)
    best_idx = jnp.zeros((h, w), dtype=jnp.float32)
    for c in range(1, cout):
        v = logit(c)
        upd = v > best_val
        best_val = jnp.where(upd, v, best_val)
        best_idx = jnp.where(upd, jnp.float32(c), best_idx)

    # ---- width-only nearest upsample at source-row resolution (tiny MXU dot). ----
    # bf16 is exact here: one-hot matrix, small integer class ids.
    wide = jnp.dot(best_idx.astype(jnp.bfloat16), p_colT_ref[...],
                   preferred_element_type=jnp.float32)          # (H, W_OUT) f32
    wide_i32 = wide.astype(jnp.int32)                           # cast once, low res

    # ---- row replication as data movement: aligned 32-row uint8 slabs. ----
    # Each 32-row output slab draws from at most two consecutive source rows
    # (requires rep >= SLAB / 2, asserted in the wrapper).
    row_iota = jax.lax.broadcasted_iota(jnp.int32, (SLAB, w_out), 0)  # hoisted
    for k in range(h_out // SLAB):
        r0 = k * SLAB
        src_lo = r0 // rep
        n_lo = min(rep * (src_lo + 1) - r0, SLAB)   # rows of this slab from src_lo
        lo = jnp.broadcast_to(wide_i32[src_lo:src_lo + 1, :], (SLAB, w_out))
        if n_lo >= SLAB:
            slab = lo
        else:
            hi = jnp.broadcast_to(wide_i32[src_lo + 1:src_lo + 2, :], (SLAB, w_out))
            slab = jnp.where(row_iota < n_lo, lo, hi)
        # i32 -> u8 truncation is exact for the small integer label values.
        o_ref[r0:r0 + SLAB, :] = slab.astype(jnp.uint8)


def trace_wrapper_forward(x_nchw, w, b):
    """x_nchw: [1, Cin, H, W] f32; w: [Cout, Cin] f32; b: [Cout] f32 -> uint8 [480, 848]."""
    x_chw = x_nchw[0]                 # torch.squeeze(out) over the batch dim (glue)
    cin, h, wd = x_chw.shape
    cout = w.shape[0]

    # TODO(synk): PyTorch nn.Upsample(mode='nearest') computes the source index with a
    # float scale; the exact-integer floor used here matches it only when the output
    # size is an exact multiple of the input size (true for 480x848 from 16x16).
    assert H_OUT % h == 0 and W_OUT % wd == 0, "nearest-index rule requires exact multiples"
    assert H_OUT % SLAB == 0 and 2 * (H_OUT // h) >= SLAB, "32-row slab scheme assumptions"
    assert cout <= 256, "bf16 one-hot selection is exact only for class ids <= 256"

    # Column one-hot selection matrix (W, W_OUT), transposed for the width matmul.
    cols_src = (jnp.arange(W_OUT, dtype=jnp.int32) * wd) // W_OUT
    p_colT = (jnp.arange(wd, dtype=jnp.int32)[:, None]
              == cols_src[None, :]).astype(jnp.bfloat16)

    w_flat = w.reshape(-1)            # flat 1-D SMEM layout (no [Cout,Cin] padding)

    out_u8 = pl.pallas_call(
        seg_argmax_upsample_kernel,
        out_shape=jax.ShapeDtypeStruct((H_OUT, W_OUT), jnp.uint8),
        grid=(1,),                    # single step: whole workload is ~0.5 MB
        in_specs=[
            pl.BlockSpec((cin, h, wd), lambda i: (0, 0, 0)),
            pl.BlockSpec(memory_space=pltpu.MemorySpace.SMEM),
            pl.BlockSpec(memory_space=pltpu.MemorySpace.SMEM),
            pl.BlockSpec((wd, W_OUT), lambda i: (0, 0)),
        ],
        out_specs=pl.BlockSpec((H_OUT, W_OUT), lambda i: (0, 0)),
    )(x_chw, w_flat, b, p_colT)
    return out_u8


def reference_forward(x_nchw, w, b):
    """Plain-JAX reference of the same semantics, for a sanity check."""
    x = x_nchw[0]                                           # [Cin, H, W]
    logits = jnp.einsum("ck,khw->chw", w, x) + b[:, None, None]
    preds = jnp.argmax(logits, axis=0)                      # [H, W]
    h, wd = preds.shape
    rows = (jnp.arange(H_OUT) * h) // H_OUT
    cols = (jnp.arange(W_OUT) * wd) // W_OUT
    return preds[rows][:, cols].astype(jnp.uint8)


if __name__ == "__main__":
    Cin, Cout, H, W = 4, 5, 16, 16
    key = jax.random.PRNGKey(0)
    kx, kw, kb = jax.random.split(key, 3)
    x = jax.random.normal(kx, (1, Cin, H, W), dtype=jnp.float32)
    w = 0.5 * jax.random.normal(kw, (Cout, Cin), dtype=jnp.float32)
    b = 0.1 * jax.random.normal(kb, (Cout,), dtype=jnp.float32)

    labels = jax.block_until_ready(trace_wrapper_forward(x, w, b))
    assert labels.shape == (H_OUT, W_OUT), labels.shape
    assert labels.dtype == jnp.uint8, labels.dtype

    ref = jax.block_until_ready(reference_forward(x, w, b))
    assert bool(jnp.all(labels == ref)), "Pallas kernel mismatch vs JAX reference"

    print("KERNEL_OK")
</pallas_src>

<mosaic_0001>
module attributes {stable_mosaic.version = 11 : i64} {
  func.func @seg_argmax_upsample_kernel(%arg0: i32, %arg1: memref<4x16x16xf32, #tpu.memory_space<vmem>>, %arg2: memref<20xf32, #tpu.memory_space<smem>>, %arg3: memref<5xf32, #tpu.memory_space<smem>>, %arg4: memref<16x848xbf16, #tpu.memory_space<vmem>>, %arg5: memref<480x848xi8, #tpu.memory_space<vmem>>) attributes {dimension_semantics = [#tpu.dimension_semantics<arbitrary>], iteration_bounds = array<i64: 1>, scalar_prefetch = 0 : i64, scratch_operands = 0 : i64, tpu.core_type = #tpu.core_type<tc>, window_params = [{pipeline_mode = #tpu.pipeline_mode<synchronous>, transform_indices = @transform_0, window_bounds = array<i64: 4, 16, 16>}, {transform_indices = @transform_1, window_bounds = array<i64: 20>}, {transform_indices = @transform_2, window_bounds = array<i64: 5>}, {pipeline_mode = #tpu.pipeline_mode<synchronous>, transform_indices = @transform_3, window_bounds = array<i64: 16, 848>}, {pipeline_mode = #tpu.pipeline_mode<synchronous>, transform_indices = @transform_4, window_bounds = array<i64: 480, 848>}]} {
    %c0 = arith.constant 0 : index
    %c0_0 = arith.constant 0 : index
    %c0_1 = arith.constant 0 : index
    %0 = vector.load %arg1[%c0, %c0_0, %c0_1] : memref<4x16x16xf32, #tpu.memory_space<vmem>>, vector<1x16x16xf32>
    %1 = vector.shape_cast %0 : vector<1x16x16xf32> to vector<16x16xf32>
    %c1 = arith.constant 1 : index
    %c0_2 = arith.constant 0 : index
    %c0_3 = arith.constant 0 : index
    %2 = vector.load %arg1[%c1, %c0_2, %c0_3] : memref<4x16x16xf32, #tpu.memory_space<vmem>>, vector<1x16x16xf32>
    %3 = vector.shape_cast %2 : vector<1x16x16xf32> to vector<16x16xf32>
    %c2 = arith.constant 2 : index
    %c0_4 = arith.constant 0 : index
    %c0_5 = arith.constant 0 : index
    %4 = vector.load %arg1[%c2, %c0_4, %c0_5] : memref<4x16x16xf32, #tpu.memory_space<vmem>>, vector<1x16x16xf32>
    %5 = vector.shape_cast %4 : vector<1x16x16xf32> to vector<16x16xf32>
    %c3 = arith.constant 3 : index
    %c0_6 = arith.constant 0 : index
    %c0_7 = arith.constant 0 : index
    %6 = vector.load %arg1[%c3, %c0_6, %c0_7] : memref<4x16x16xf32, #tpu.memory_space<vmem>>, vector<1x16x16xf32>
    %7 = vector.shape_cast %6 : vector<1x16x16xf32> to vector<16x16xf32>
    %c0_8 = arith.constant 0 : index
    %8 = memref.load %arg2[%c0_8] : memref<20xf32, #tpu.memory_space<smem>>
    %9 = vector.broadcast %8 : f32 to vector<16x16xf32>
    %10 = arith.mulf %1, %9 : vector<16x16xf32>
    %c1_9 = arith.constant 1 : index
    %11 = memref.load %arg2[%c1_9] : memref<20xf32, #tpu.memory_space<smem>>
    %12 = vector.broadcast %11 : f32 to vector<16x16xf32>
    %13 = arith.mulf %3, %12 : vector<16x16xf32>
    %14 = arith.addf %10, %13 : vector<16x16xf32>
    %c2_10 = arith.constant 2 : index
    %15 = memref.load %arg2[%c2_10] : memref<20xf32, #tpu.memory_space<smem>>
    %16 = vector.broadcast %15 : f32 to vector<16x16xf32>
    %17 = arith.mulf %5, %16 : vector<16x16xf32>
    %18 = arith.addf %14, %17 : vector<16x16xf32>
    %c3_11 = arith.constant 3 : index
    %19 = memref.load %arg2[%c3_11] : memref<20xf32, #tpu.memory_space<smem>>
    %20 = vector.broadcast %19 : f32 to vector<16x16xf32>
    %21 = arith.mulf %7, %20 : vector<16x16xf32>
    %22 = arith.addf %18, %21 : vector<16x16xf32>
    %c0_12 = arith.constant 0 : index
    %23 = memref.load %arg3[%c0_12] : memref<5xf32, #tpu.memory_space<smem>>
    %24 = vector.broadcast %23 : f32 to vector<16x16xf32>
    %25 = arith.addf %22, %24 : vector<16x16xf32>
    %cst = arith.constant 0.000000e+00 : f32
    %26 = vector.broadcast %cst : f32 to vector<16x16xf32>
    %c4 = arith.constant 4 : index
    %27 = memref.load %arg2[%c4] : memref<20xf32, #tpu.memory_space<smem>>
    %28 = vector.broadcast %27 : f32 to vector<16x16xf32>
    %29 = arith.mulf %1, %28 : vector<16x16xf32>
    %c5 = arith.constant 5 : index
    %30 = memref.load %arg2[%c5] : memref<20xf32, #tpu.memory_space<smem>>
    %31 = vector.broadcast %30 : f32 to vector<16x16xf32>
    %32 = arith.mulf %3, %31 : vector<16x16xf32>
    %33 = arith.addf %29, %32 : vector<16x16xf32>
    %c6 = arith.constant 6 : index
    %34 = memref.load %arg2[%c6] : memref<20xf32, #tpu.memory_space<smem>>
    %35 = vector.broadcast %34 : f32 to vector<16x16xf32>
    %36 = arith.mulf %5, %35 : vector<16x16xf32>
    %37 = arith.addf %33, %36 : vector<16x16xf32>
    %c7 = arith.constant 7 : index
    %38 = memref.load %arg2[%c7] : memref<20xf32, #tpu.memory_space<smem>>
    %39 = vector.broadcast %38 : f32 to vector<16x16xf32>
    %40 = arith.mulf %7, %39 : vector<16x16xf32>
    %41 = arith.addf %37, %40 : vector<16x16xf32>
    %c1_13 = arith.constant 1 : index
    %42 = memref.load %arg3[%c1_13] : memref<5xf32, #tpu.memory_space<smem>>
    %43 = vector.broadcast %42 : f32 to vector<16x16xf32>
    %44 = arith.addf %41, %43 : vector<16x16xf32>
    %45 = arith.cmpf ogt, %44, %25 : vector<16x16xf32>
    %46 = arith.select %45, %44, %25 : vector<16x16xi1>, vector<16x16xf32>
    %cst_14 = arith.constant 1.000000e+00 : f32
    %47 = vector.broadcast %cst_14 : f32 to vector<16x16xf32>
    %48 = arith.select %45, %47, %26 : vector<16x16xi1>, vector<16x16xf32>
    %c8 = arith.constant 8 : index
    %49 = memref.load %arg2[%c8] : memref<20xf32, #tpu.memory_space<smem>>
    %50 = vector.broadcast %49 : f32 to vector<16x16xf32>
    %51 = arith.mulf %1, %50 : vector<16x16xf32>
    %c9 = arith.constant 9 : index
    %52 = memref.load %arg2[%c9] : memref<20xf32, #tpu.memory_space<smem>>
    %53 = vector.broadcast %52 : f32 to vector<16x16xf32>
    %54 = arith.mulf %3, %53 : vector<16x16xf32>
    %55 = arith.addf %51, %54 : vector<16x16xf32>
    %c10 = arith.constant 10 : index
    %56 = memref.load %arg2[%c10] : memref<20xf32, #tpu.memory_space<smem>>
    %57 = vector.broadcast %56 : f32 to vector<16x16xf32>
    %58 = arith.mulf %5, %57 : vector<16x16xf32>
    %59 = arith.addf %55, %58 : vector<16x16xf32>
    %c11 = arith.constant 11 : index
    %60 = memref.load %arg2[%c11] : memref<20xf32, #tpu.memory_space<smem>>
    %61 = vector.broadcast %60 : f32 to vector<16x16xf32>
    %62 = arith.mulf %7, %61 : vector<16x16xf32>
    %63 = arith.addf %59, %62 : vector<16x16xf32>
    %c2_15 = arith.constant 2 : index
    %64 = memref.load %arg3[%c2_15] : memref<5xf32, #tpu.memory_space<smem>>
    %65 = vector.broadcast %64 : f32 to vector<16x16xf32>
    %66 = arith.addf %63, %65 : vector<16x16xf32>
    %67 = arith.cmpf ogt, %66, %46 : vector<16x16xf32>
    %68 = arith.select %67, %66, %46 : vector<16x16xi1>, vector<16x16xf32>
    %cst_16 = arith.constant 2.000000e+00 : f32
    %69 = vector.broadcast %cst_16 : f32 to vector<16x16xf32>
    %70 = arith.select %67, %69, %48 : vector<16x16xi1>, vector<16x16xf32>
    %c12 = arith.constant 12 : index
    %71 = memref.load %arg2[%c12] : memref<20xf32, #tpu.memory_space<smem>>
    %72 = vector.broadcast %71 : f32 to vector<16x16xf32>
    %73 = arith.mulf %1, %72 : vector<16x16xf32>
    %c13 = arith.constant 13 : index
    %74 = memref.load %arg2[%c13] : memref<20xf32, #tpu.memory_space<smem>>
    %75 = vector.broadcast %74 : f32 to vector<16x16xf32>
    %76 = arith.mulf %3, %75 : vector<16x16xf32>
    %77 = arith.addf %73, %76 : vector<16x16xf32>
    %c14 = arith.constant 14 : index
    %78 = memref.load %arg2[%c14] : memref<20xf32, #tpu.memory_space<smem>>
    %79 = vector.broadcast %78 : f32 to vector<16x16xf32>
    %80 = arith.mulf %5, %79 : vector<16x16xf32>
    %81 = arith.addf %77, %80 : vector<16x16xf32>
    %c15 = arith.constant 15 : index
    %82 = memref.load %arg2[%c15] : memref<20xf32, #tpu.memory_space<smem>>
    %83 = vector.broadcast %82 : f32 to vector<16x16xf32>
    %84 = arith.mulf %7, %83 : vector<16x16xf32>
    %85 = arith.addf %81, %84 : vector<16x16xf32>
    %c3_17 = arith.constant 3 : index
    %86 = memref.load %arg3[%c3_17] : memref<5xf32, #tpu.memory_space<smem>>
    %87 = vector.broadcast %86 : f32 to vector<16x16xf32>
    %88 = arith.addf %85, %87 : vector<16x16xf32>
    %89 = arith.cmpf ogt, %88, %68 : vector<16x16xf32>
    %90 = arith.select %89, %88, %68 : vector<16x16xi1>, vector<16x16xf32>
    %cst_18 = arith.constant 3.000000e+00 : f32
    %91 = vector.broadcast %cst_18 : f32 to vector<16x16xf32>
    %92 = arith.select %89, %91, %70 : vector<16x16xi1>, vector<16x16xf32>
    %c16 = arith.constant 16 : index
    %93 = memref.load %arg2[%c16] : memref<20xf32, #tpu.memory_space<smem>>
    %94 = vector.broadcast %93 : f32 to vector<16x16xf32>
    %95 = arith.mulf %1, %94 : vector<16x16xf32>
    %c17 = arith.constant 17 : index
    %96 = memref.load %arg2[%c17] : memref<20xf32, #tpu.memory_space<smem>>
    %97 = vector.broadcast %96 : f32 to vector<16x16xf32>
    %98 = arith.mulf %3, %97 : vector<16x16xf32>
    %99 = arith.addf %95, %98 : vector<16x16xf32>
    %c18 = arith.constant 18 : index
    %100 = memref.load %arg2[%c18] : memref<20xf32, #tpu.memory_space<smem>>
    %101 = vector.broadcast %100 : f32 to vector<16x16xf32>
    %102 = arith.mulf %5, %101 : vector<16x16xf32>
    %103 = arith.addf %99, %102 : vector<16x16xf32>
    %c19 = arith.constant 19 : index
    %104 = memref.load %arg2[%c19] : memref<20xf32, #tpu.memory_space<smem>>
    %105 = vector.broadcast %104 : f32 to vector<16x16xf32>
    %106 = arith.mulf %7, %105 : vector<16x16xf32>
    %107 = arith.addf %103, %106 : vector<16x16xf32>
    %c4_19 = arith.constant 4 : index
    %108 = memref.load %arg3[%c4_19] : memref<5xf32, #tpu.memory_space<smem>>
    %109 = vector.broadcast %108 : f32 to vector<16x16xf32>
    %110 = arith.addf %107, %109 : vector<16x16xf32>
    %111 = arith.cmpf ogt, %110, %90 : vector<16x16xf32>
    %cst_20 = arith.constant 4.000000e+00 : f32
    %112 = vector.broadcast %cst_20 : f32 to vector<16x16xf32>
    %113 = arith.select %111, %112, %92 : vector<16x16xi1>, vector<16x16xf32>
    %114 = arith.truncf %113 : vector<16x16xf32> to vector<16x16xbf16>
    %c0_21 = arith.constant 0 : index
    %c0_22 = arith.constant 0 : index
    %115 = vector.load %arg4[%c0_21, %c0_22] : memref<16x848xbf16, #tpu.memory_space<vmem>>, vector<16x848xbf16>
    %cst_23 = arith.constant dense<0.000000e+00> : vector<16x848xf32>
    %116 = tpu.matmul %114, %115, %cst_23 {dimension_numbers = #tpu.dot_dimension_numbers<[1], [0], [0], [1], [0, 0, 1, 1], [], []>} : vector<16x16xbf16>, vector<16x848xbf16>, vector<16x848xf32> -> vector<16x848xf32>
    %117 = arith.fptosi %116 : vector<16x848xf32> to vector<16x848xi32>
    %118 = tpu.iota {dimensions = array<i32: 0>} : vector<32x848xi32>
    %119 = vector.extract_strided_slice %117 {offsets = [0, 0], sizes = [1, 848], strides = [1, 1]} : vector<16x848xi32> to vector<1x848xi32>
    %120 = vector.shape_cast %119 : vector<1x848xi32> to vector<1x848xi32>
    %121 = vector.broadcast %120 : vector<1x848xi32> to vector<32x848xi32>
    %122 = vector.extract_strided_slice %117 {offsets = [1, 0], sizes = [1, 848], strides = [1, 1]} : vector<16x848xi32> to vector<1x848xi32>
    %123 = vector.shape_cast %122 : vector<1x848xi32> to vector<1x848xi32>
    %124 = vector.broadcast %123 : vector<1x848xi32> to vector<32x848xi32>
    %c30_i32 = arith.constant 30 : i32
    %125 = vector.broadcast %c30_i32 : i32 to vector<32x848xi32>
    %126 = arith.cmpi slt, %118, %125 : vector<32x848xi32>
    %127 = arith.select %126, %121, %124 : vector<32x848xi1>, vector<32x848xi32>
    %128 = arith.trunci %127 : vector<32x848xi32> to vector<32x848xi8>
    %c0_24 = arith.constant 0 : index
    %c0_25 = arith.constant 0 : index
    %129 = vector.load %arg5[%c0_24, %c0_25] : memref<480x848xi8, #tpu.memory_space<vmem>>, vector<32x848xi8>
    tpu.vector_store %arg5[%c0_24, %c0_25], %128 {strides = array<i32>} : memref<480x848xi8, #tpu.memory_space<vmem>>, vector<32x848xi8>,
    %130 = vector.extract_strided_slice %117 {offsets = [1, 0], sizes = [1, 848], strides = [1, 1]} : vector<16x848xi32> to vector<1x848xi32>
    %131 = vector.shape_cast %130 : vector<1x848xi32> to vector<1x848xi32>
    %132 = vector.broadcast %131 : vector<1x848xi32> to vector<32x848xi32>
    %133 = vector.extract_strided_slice %117 {offsets = [2, 0], sizes = [1, 848], strides = [1, 1]} : vector<16x848xi32> to vector<1x848xi32>
    %134 = vector.shape_cast %133 : vector<1x848xi32> to vector<1x848xi32>
    %135 = vector.broadcast %134 : vector<1x848xi32> to vector<32x848xi32>
    %c28_i32 = arith.constant 28 : i32
    %136 = vector.broadcast %c28_i32 : i32 to vector<32x848xi32>
    %137 = arith.cmpi slt, %118, %136 : vector<32x848xi32>
    %138 = arith.select %137, %132, %135 : vector<32x848xi1>, vector<32x848xi32>
    %139 = arith.trunci %138 : vector<32x848xi32> to vector<32x848xi8>
    %c32 = arith.constant 32 : index
    %c0_26 = arith.constant 0 : index
    %140 = vector.load %arg5[%c32, %c0_26] : memref<480x848xi8, #tpu.memory_space<vmem>>, vector<32x848xi8>
    tpu.vector_store %arg5[%c32, %c0_26], %139 {strides = array<i32>} : memref<480x848xi8, #tpu.memory_space<vmem>>, vector<32x848xi8>,
    %141 = vector.extract_strided_slice %117 {offsets = [2, 0], sizes = [1, 848], strides = [1, 1]} : vector<16x848xi32> to vector<1x848xi32>
    %142 = vector.shape_cast %141 : vector<1x848xi32> to vector<1x848xi32>
    %143 = vector.broadcast %142 : vector<1x848xi32> to vector<32x848xi32>
    %144 = vector.extract_strided_slice %117 {offsets = [3, 0], sizes = [1, 848], strides = [1, 1]} : vector<16x848xi32> to vector<1x848xi32>
    %145 = vector.shape_cast %144 : vector<1x848xi32> to vector<1x848xi32>
    %146 = vector.broadcast %145 : vector<1x848xi32> to vector<32x848xi32>
    %c26_i32 = arith.constant 26 : i32
    %147 = vector.broadcast %c26_i32 : i32 to vector<32x848xi32>
    %148 = arith.cmpi slt, %118, %147 : vector<32x848xi32>
    %149 = arith.select %148, %143, %146 : vector<32x848xi1>, vector<32x848xi32>
    %150 = arith.trunci %149 : vector<32x848xi32> to vector<32x848xi8>
    %c64 = arith.constant 64 : index
    %c0_27 = arith.constant 0 : index
    %151 = vector.load %arg5[%c64, %c0_27] : memref<480x848xi8, #tpu.memory_space<vmem>>, vector<32x848xi8>
    tpu.vector_store %arg5[%c64, %c0_27], %150 {strides = array<i32>} : memref<480x848xi8, #tpu.memory_space<vmem>>, vector<32x848xi8>,
    %152 = vector.extract_strided_slice %117 {offsets = [3, 0], sizes = [1, 848], strides = [1, 1]} : vector<16x848xi32> to vector<1x848xi32>
    %153 = vector.shape_cast %152 : vector<1x848xi32> to vector<1x848xi32>
    %154 = vector.broadcast %153 : vector<1x848xi32> to vector<32x848xi32>
    %155 = vector.extract_strided_slice %117 {offsets = [4, 0], sizes = [1, 848], strides = [1, 1]} : vector<16x848xi32> to vector<1x848xi32>
    %156 = vector.shape_cast %155 : vector<1x848xi32> to vector<1x848xi32>
    %157 = vector.broadcast %156 : vector<1x848xi32> to vector<32x848xi32>
    %c24_i32 = arith.constant 24 : i32
    %158 = vector.broadcast %c24_i32 : i32 to vector<32x848xi32>
    %159 = arith.cmpi slt, %118, %158 : vector<32x848xi32>
    %160 = arith.select %159, %154, %157 : vector<32x848xi1>, vector<32x848xi32>
    %161 = arith.trunci %160 : vector<32x848xi32> to vector<32x848xi8>
    %c96 = arith.constant 96 : index
    %c0_28 = arith.constant 0 : index
    %162 = vector.load %arg5[%c96, %c0_28] : memref<480x848xi8, #tpu.memory_space<vmem>>, vector<32x848xi8>
    tpu.vector_store %arg5[%c96, %c0_28], %161 {strides = array<i32>} : memref<480x848xi8, #tpu.memory_space<vmem>>, vector<32x848xi8>,
    %163 = vector.extract_strided_slice %117 {offsets = [4, 0], sizes = [1, 848], strides = [1, 1]} : vector<16x848xi32> to vector<1x848xi32>
    %164 = vector.shape_cast %163 : vector<1x848xi32> to vector<1x848xi32>
    %165 = vector.broadcast %164 : vector<1x848xi32> to vector<32x848xi32>
    %166 = vector.extract_strided_slice %117 {offsets = [5, 0], sizes = [1, 848], strides = [1, 1]} : vector<16x848xi32> to vector<1x848xi32>
    %167 = vector.shape_cast %166 : vector<1x848xi32> to vector<1x848xi32>
    %168 = vector.broadcast %167 : vector<1x848xi32> to vector<32x848xi32>
    %c22_i32 = arith.constant 22 : i32
    %169 = vector.broadcast %c22_i32 : i32 to vector<32x848xi32>
    %170 = arith.cmpi slt, %118, %169 : vector<32x848xi32>
    %171 = arith.select %170, %165, %168 : vector<32x848xi1>, vector<32x848xi32>
    %172 = arith.trunci %171 : vector<32x848xi32> to vector<32x848xi8>
    %c128 = arith.constant 128 : index
    %c0_29 = arith.constant 0 : index
    %173 = vector.load %arg5[%c128, %c0_29] : memref<480x848xi8, #tpu.memory_space<vmem>>, vector<32x848xi8>
    tpu.vector_store %arg5[%c128, %c0_29], %172 {strides = array<i32>} : memref<480x848xi8, #tpu.memory_space<vmem>>, vector<32x848xi8>,
    %174 = vector.extract_strided_slice %117 {offsets = [5, 0], sizes = [1, 848], strides = [1, 1]} : vector<16x848xi32> to vector<1x848xi32>
    %175 = vector.shape_cast %174 : vector<1x848xi32> to vector<1x848xi32>
    %176 = vector.broadcast %175 : vector<1x848xi32> to vector<32x848xi32>
    %177 = vector.extract_strided_slice %117 {offsets = [6, 0], sizes = [1, 848], strides = [1, 1]} : vector<16x848xi32> to vector<1x848xi32>
    %178 = vector.shape_cast %177 : vector<1x848xi32> to vector<1x848xi32>
    %179 = vector.broadcast %178 : vector<1x848xi32> to vector<32x848xi32>
    %c20_i32 = arith.constant 20 : i32
    %180 = vector.broadcast %c20_i32 : i32 to vector<32x848xi32>
    %181 = arith.cmpi slt, %118, %180 : vector<32x848xi32>
    %182 = arith.select %181, %176, %179 : vector<32x848xi1>, vector<32x848xi32>
    %183 = arith.trunci %182 : vector<32x848xi32> to vector<32x848xi8>
    %c160 = arith.constant 160 : index
    %c0_30 = arith.constant 0 : index
    %184 = vector.load %arg5[%c160, %c0_30] : memref<480x848xi8, #tpu.memory_space<vmem>>, vector<32x848xi8>
    tpu.vector_store %arg5[%c160, %c0_30], %183 {strides = array<i32>} : memref<480x848xi8, #tpu.memory_space<vmem>>, vector<32x848xi8>,
    %185 = vector.extract_strided_slice %117 {offsets = [6, 0], sizes = [1, 848], strides = [1, 1]} : vector<16x848xi32> to vector<1x848xi32>
    %186 = vector.shape_cast %185 : vector<1x848xi32> to vector<1x848xi32>
    %187 = vector.broadcast %186 : vector<1x848xi32> to vector<32x848xi32>
    %188 = vector.extract_strided_slice %117 {offsets = [7, 0], sizes = [1, 848], strides = [1, 1]} : vector<16x848xi32> to vector<1x848xi32>
    %189 = vector.shape_cast %188 : vector<1x848xi32> to vector<1x848xi32>
    %190 = vector.broadcast %189 : vector<1x848xi32> to vector<32x848xi32>
    %c18_i32 = arith.constant 18 : i32
    %191 = vector.broadcast %c18_i32 : i32 to vector<32x848xi32>
    %192 = arith.cmpi slt, %118, %191 : vector<32x848xi32>
    %193 = arith.select %192, %187, %190 : vector<32x848xi1>, vector<32x848xi32>
    %194 = arith.trunci %193 : vector<32x848xi32> to vector<32x848xi8>
    %c192 = arith.constant 192 : index
    %c0_31 = arith.constant 0 : index
    %195 = vector.load %arg5[%c192, %c0_31] : memref<480x848xi8, #tpu.memory_space<vmem>>, vector<32x848xi8>
    tpu.vector_store %arg5[%c192, %c0_31], %194 {strides = array<i32>} : memref<480x848xi8, #tpu.memory_space<vmem>>, vector<32x848xi8>,
    %196 = vector.extract_strided_slice %117 {offsets = [7, 0], sizes = [1, 848], strides = [1, 1]} : vector<16x848xi32> to vector<1x848xi32>
    %197 = vector.shape_cast %196 : vector<1x848xi32> to vector<1x848xi32>
    %198 = vector.broadcast %197 : vector<1x848xi32> to vector<32x848xi32>
    %199 = vector.extract_strided_slice %117 {offsets = [8, 0], sizes = [1, 848], strides = [1, 1]} : vector<16x848xi32> to vector<1x848xi32>
    %200 = vector.shape_cast %199 : vector<1x848xi32> to vector<1x848xi32>
    %201 = vector.broadcast %200 : vector<1x848xi32> to vector<32x848xi32>
    %c16_i32 = arith.constant 16 : i32
    %202 = vector.broadcast %c16_i32 : i32 to vector<32x848xi32>
    %203 = arith.cmpi slt, %118, %202 : vector<32x848xi32>
    %204 = arith.select %203, %198, %201 : vector<32x848xi1>, vector<32x848xi32>
    %205 = arith.trunci %204 : vector<32x848xi32> to vector<32x848xi8>
    %c224 = arith.constant 224 : index
    %c0_32 = arith.constant 0 : index
    %206 = vector.load %arg5[%c224, %c0_32] : memref<480x848xi8, #tpu.memory_space<vmem>>, vector<32x848xi8>
    tpu.vector_store %arg5[%c224, %c0_32], %205 {strides = array<i32>} : memref<480x848xi8, #tpu.memory_space<vmem>>, vector<32x848xi8>,
    %207 = vector.extract_strided_slice %117 {offsets = [8, 0], sizes = [1, 848], strides = [1, 1]} : vector<16x848xi32> to vector<1x848xi32>
    %208 = vector.shape_cast %207 : vector<1x848xi32> to vector<1x848xi32>
    %209 = vector.broadcast %208 : vector<1x848xi32> to vector<32x848xi32>
    %210 = vector.extract_strided_slice %117 {offsets = [9, 0], sizes = [1, 848], strides = [1, 1]} : vector<16x848xi32> to vector<1x848xi32>
    %211 = vector.shape_cast %210 : vector<1x848xi32> to vector<1x848xi32>
    %212 = vector.broadcast %211 : vector<1x848xi32> to vector<32x848xi32>
    %c14_i32 = arith.constant 14 : i32
    %213 = vector.broadcast %c14_i32 : i32 to vector<32x848xi32>
    %214 = arith.cmpi slt, %118, %213 : vector<32x848xi32>
    %215 = arith.select %214, %209, %212 : vector<32x848xi1>, vector<32x848xi32>
    %216 = arith.trunci %215 : vector<32x848xi32> to vector<32x848xi8>
    %c256 = arith.constant 256 : index
    %c0_33 = arith.constant 0 : index
    %217 = vector.load %arg5[%c256, %c0_33] : memref<480x848xi8, #tpu.memory_space<vmem>>, vector<32x848xi8>
    tpu.vector_store %arg5[%c256, %c0_33], %216 {strides = array<i32>} : memref<480x848xi8, #tpu.memory_space<vmem>>, vector<32x848xi8>,
    %218 = vector.extract_strided_slice %117 {offsets = [9, 0], sizes = [1, 848], strides = [1, 1]} : vector<16x848xi32> to vector<1x848xi32>
    %219 = vector.shape_cast %218 : vector<1x848xi32> to vector<1x848xi32>
    %220 = vector.broadcast %219 : vector<1x848xi32> to vector<32x848xi32>
    %221 = vector.extract_strided_slice %117 {offsets = [10, 0], sizes = [1, 848], strides = [1, 1]} : vector<16x848xi32> to vector<1x848xi32>
    %222 = vector.shape_cast %221 : vector<1x848xi32> to vector<1x848xi32>
    %223 = vector.broadcast %222 : vector<1x848xi32> to vector<32x848xi32>
    %c12_i32 = arith.constant 12 : i32
    %224 = vector.broadcast %c12_i32 : i32 to vector<32x848xi32>
    %225 = arith.cmpi slt, %118, %224 : vector<32x848xi32>
    %226 = arith.select %225, %220, %223 : vector<32x848xi1>, vector<32x848xi32>
    %227 = arith.trunci %226 : vector<32x848xi32> to vector<32x848xi8>
    %c288 = arith.constant 288 : index
    %c0_34 = arith.constant 0 : index
    %228 = vector.load %arg5[%c288, %c0_34] : memref<480x848xi8, #tpu.memory_space<vmem>>, vector<32x848xi8>
    tpu.vector_store %arg5[%c288, %c0_34], %227 {strides = array<i32>} : memref<480x848xi8, #tpu.memory_space<vmem>>, vector<32x848xi8>,
    %229 = vector.extract_strided_slice %117 {offsets = [10, 0], sizes = [1, 848], strides = [1, 1]} : vector<16x848xi32> to vector<1x848xi32>
    %230 = vector.shape_cast %229 : vector<1x848xi32> to vector<1x848xi32>
    %231 = vector.broadcast %230 : vector<1x848xi32> to vector<32x848xi32>
    %232 = vector.extract_strided_slice %117 {offsets = [11, 0], sizes = [1, 848], strides = [1, 1]} : vector<16x848xi32> to vector<1x848xi32>
    %233 = vector.shape_cast %232 : vector<1x848xi32> to vector<1x848xi32>
    %234 = vector.broadcast %233 : vector<1x848xi32> to vector<32x848xi32>
    %c10_i32 = arith.constant 10 : i32
    %235 = vector.broadcast %c10_i32 : i32 to vector<32x848xi32>
    %236 = arith.cmpi slt, %118, %235 : vector<32x848xi32>
    %237 = arith.select %236, %231, %234 : vector<32x848xi1>, vector<32x848xi32>
    %238 = arith.trunci %237 : vector<32x848xi32> to vector<32x848xi8>
    %c320 = arith.constant 320 : index
    %c0_35 = arith.constant 0 : index
    %239 = vector.load %arg5[%c320, %c0_35] : memref<480x848xi8, #tpu.memory_space<vmem>>, vector<32x848xi8>
    tpu.vector_store %arg5[%c320, %c0_35], %238 {strides = array<i32>} : memref<480x848xi8, #tpu.memory_space<vmem>>, vector<32x848xi8>,
    %240 = vector.extract_strided_slice %117 {offsets = [11, 0], sizes = [1, 848], strides = [1, 1]} : vector<16x848xi32> to vector<1x848xi32>
    %241 = vector.shape_cast %240 : vector<1x848xi32> to vector<1x848xi32>
    %242 = vector.broadcast %241 : vector<1x848xi32> to vector<32x848xi32>
    %243 = vector.extract_strided_slice %117 {offsets = [12, 0], sizes = [1, 848], strides = [1, 1]} : vector<16x848xi32> to vector<1x848xi32>
    %244 = vector.shape_cast %243 : vector<1x848xi32> to vector<1x848xi32>
    %245 = vector.broadcast %244 : vector<1x848xi32> to vector<32x848xi32>
    %c8_i32 = arith.constant 8 : i32
    %246 = vector.broadcast %c8_i32 : i32 to vector<32x848xi32>
    %247 = arith.cmpi slt, %118, %246 : vector<32x848xi32>
    %248 = arith.select %247, %242, %245 : vector<32x848xi1>, vector<32x848xi32>
    %249 = arith.trunci %248 : vector<32x848xi32> to vector<32x848xi8>
    %c352 = arith.constant 352 : index
    %c0_36 = arith.constant 0 : index
    %250 = vector.load %arg5[%c352, %c0_36] : memref<480x848xi8, #tpu.memory_space<vmem>>, vector<32x848xi8>
    tpu.vector_store %arg5[%c352, %c0_36], %249 {strides = array<i32>} : memref<480x848xi8, #tpu.memory_space<vmem>>, vector<32x848xi8>,
    %251 = vector.extract_strided_slice %117 {offsets = [12, 0], sizes = [1, 848], strides = [1, 1]} : vector<16x848xi32> to vector<1x848xi32>
    %252 = vector.shape_cast %251 : vector<1x848xi32> to vector<1x848xi32>
    %253 = vector.broadcast %252 : vector<1x848xi32> to vector<32x848xi32>
    %254 = vector.extract_strided_slice %117 {offsets = [13, 0], sizes = [1, 848], strides = [1, 1]} : vector<16x848xi32> to vector<1x848xi32>
    %255 = vector.shape_cast %254 : vector<1x848xi32> to vector<1x848xi32>
    %256 = vector.broadcast %255 : vector<1x848xi32> to vector<32x848xi32>
    %c6_i32 = arith.constant 6 : i32
    %257 = vector.broadcast %c6_i32 : i32 to vector<32x848xi32>
    %258 = arith.cmpi slt, %118, %257 : vector<32x848xi32>
    %259 = arith.select %258, %253, %256 : vector<32x848xi1>, vector<32x848xi32>
    %260 = arith.trunci %259 : vector<32x848xi32> to vector<32x848xi8>
    %c384 = arith.constant 384 : index
    %c0_37 = arith.constant 0 : index
    %261 = vector.load %arg5[%c384, %c0_37] : memref<480x848xi8, #tpu.memory_space<vmem>>, vector<32x848xi8>
    tpu.vector_store %arg5[%c384, %c0_37], %260 {strides = array<i32>} : memref<480x848xi8, #tpu.memory_space<vmem>>, vector<32x848xi8>,
    %262 = vector.extract_strided_slice %117 {offsets = [13, 0], sizes = [1, 848], strides = [1, 1]} : vector<16x848xi32> to vector<1x848xi32>
    %263 = vector.shape_cast %262 : vector<1x848xi32> to vector<1x848xi32>
    %264 = vector.broadcast %263 : vector<1x848xi32> to vector<32x848xi32>
    %265 = vector.extract_strided_slice %117 {offsets = [14, 0], sizes = [1, 848], strides = [1, 1]} : vector<16x848xi32> to vector<1x848xi32>
    %266 = vector.shape_cast %265 : vector<1x848xi32> to vector<1x848xi32>
    %267 = vector.broadcast %266 : vector<1x848xi32> to vector<32x848xi32>
    %c4_i32 = arith.constant 4 : i32
    %268 = vector.broadcast %c4_i32 : i32 to vector<32x848xi32>
    %269 = arith.cmpi slt, %118, %268 : vector<32x848xi32>
    %270 = arith.select %269, %264, %267 : vector<32x848xi1>, vector<32x848xi32>
    %271 = arith.trunci %270 : vector<32x848xi32> to vector<32x848xi8>
    %c416 = arith.constant 416 : index
    %c0_38 = arith.constant 0 : index
    %272 = vector.load %arg5[%c416, %c0_38] : memref<480x848xi8, #tpu.memory_space<vmem>>, vector<32x848xi8>
    tpu.vector_store %arg5[%c416, %c0_38], %271 {strides = array<i32>} : memref<480x848xi8, #tpu.memory_space<vmem>>, vector<32x848xi8>,
    %273 = vector.extract_strided_slice %117 {offsets = [14, 0], sizes = [1, 848], strides = [1, 1]} : vector<16x848xi32> to vector<1x848xi32>
    %274 = vector.shape_cast %273 : vector<1x848xi32> to vector<1x848xi32>
    %275 = vector.broadcast %274 : vector<1x848xi32> to vector<32x848xi32>
    %276 = vector.extract_strided_slice %117 {offsets = [15, 0], sizes = [1, 848], strides = [1, 1]} : vector<16x848xi32> to vector<1x848xi32>
    %277 = vector.shape_cast %276 : vector<1x848xi32> to vector<1x848xi32>
    %278 = vector.broadcast %277 : vector<1x848xi32> to vector<32x848xi32>
    %c2_i32 = arith.constant 2 : i32
    %279 = vector.broadcast %c2_i32 : i32 to vector<32x848xi32>
    %280 = arith.cmpi slt, %118, %279 : vector<32x848xi32>
    %281 = arith.select %280, %275, %278 : vector<32x848xi1>, vector<32x848xi32>
    %282 = arith.trunci %281 : vector<32x848xi32> to vector<32x848xi8>
    %c448 = arith.constant 448 : index
    %c0_39 = arith.constant 0 : index
    %283 = vector.load %arg5[%c448, %c0_39] : memref<480x848xi8, #tpu.memory_space<vmem>>, vector<32x848xi8>
    tpu.vector_store %arg5[%c448, %c0_39], %282 {strides = array<i32>} : memref<480x848xi8, #tpu.memory_space<vmem>>, vector<32x848xi8>,
    return
  }
  func.func @transform_0(%arg0: i32) -> (i32, i32, i32) {
    %c0_i32 = arith.constant 0 : i32
    %c0_i32_0 = arith.constant 0 : i32
    %c0_i32_1 = arith.constant 0 : i32
    %c0_i32_2 = arith.constant 0 : i32
    return %c0_i32, %c0_i32_0, %c0_i32_1 : i32, i32, i32
  }
  func.func @transform_1(%arg0: i32) -> i32 {
    %c0_i32 = arith.constant 0 : i32
    %c0_i32_0 = arith.constant 0 : i32
    return %c0_i32 : i32
  }
  func.func @transform_2(%arg0: i32) -> i32 {
    %c0_i32 = arith.constant 0 : i32
    %c0_i32_0 = arith.constant 0 : i32
    return %c0_i32 : i32
  }
  func.func @transform_3(%arg0: i32) -> (i32, i32) {
    %c0_i32 = arith.constant 0 : i32
    %c0_i32_0 = arith.constant 0 : i32
    %c0_i32_1 = arith.constant 0 : i32
    return %c0_i32, %c0_i32_0 : i32, i32
  }
  func.func @transform_4(%arg0: i32) -> (i32, i32) {
    %c0_i32 = arith.constant 0 : i32
    %c0_i32_0 = arith.constant 0 : i32
    %c0_i32_1 = arith.constant 0 : i32
    return %c0_i32, %c0_i32_0 : i32, i32
  }
}

</mosaic_0001>

<llo_original>
// kernel: tpu_custom_call.1
$region0: #{tpu_custom_call.1}
  #allocation0 [shape = 'u32[]', space=smem, size = 0x4, offset = 0x4, fixed_abs, tag = 'smem constant byte address 0x4 - core index']
  #allocation1 [shape = 'u32[144,128]{1,0:T(1,128)}', space=vmem, size = 0x12000, scoped, tag = 'internal scratch']
  %s0 = inlined_call_operand.hbm [shape: f32[4,16,16], index: 0, kind: input, shape index: {}]
  %s1 = inlined_call_operand.vmem [shape: f32[20], index: 1, kind: input, shape index: {}]
  %s2 = inlined_call_operand.vmem [shape: f32[5], index: 2, kind: input, shape index: {}]
  %s3 = inlined_call_operand.hbm [shape: bf16[16,848], index: 3, kind: input, shape index: {}]
  %s4 = inlined_call_operand.hbm [shape: u8[480,848], index: 4, kind: output, shape index: {}]
  %s5 = sld [smem:[#allocation0]]
  $region42: #{tpu_custom_call.1} parent=0
    _
  %s7 = ssub.s32 1, %s5
  %s8 = scalar_select 0, %s7, %s5
  $region1: #{tpu_custom_call.1} parent=0
    #allocation2 [shape = 'u8[32768]{0}', space=vmem, size = 0x8000, scoped, tag = 'input window, operand 0, single buffered']
    #allocation3 [shape = 's32[1]{0}', space=sflag, size = 0x4, scoped, tag = 'scoped memory for tpu_custom_call.1']
    #allocation4 [shape = 's32[1]{0}', space=sflag, size = 0x4, scoped, tag = 'scoped memory for tpu_custom_call.1']
    #allocation5 [shape = 's32[1]{0}', space=sflag, size = 0x4, scoped, tag = 'scoped memory for tpu_custom_call.1']
    #allocation6 [shape = 'u8[512]{0}', space=smem, size = 0x200, scoped, tag = 'input window, operand 1, single buffered']
    #allocation7 [shape = 'u8[512]{0}', space=smem, size = 0x200, scoped, tag = 'input window, operand 2, single buffered']
    #allocation8 [shape = 's32[1]{0}', space=sflag, size = 0x4, scoped, tag = 'scoped memory for tpu_custom_call.1']
    #allocation9 [shape = 'u8[28672]{0}', space=vmem, size = 0x7000, scoped, tag = 'input window, operand 3, single buffered']
    #allocation10 [shape = 's32[1]{0}', space=sflag, size = 0x4, scoped, tag = 'scoped memory for tpu_custom_call.1']
    #allocation11 [shape = 'u8[430080]{0}', space=vmem, size = 0x69000, scoped, tag = 'output window, operand 0, single buffered']
    %9 = vsyncpa [#allocation3], 0
    %10 = vsyncpa [#allocation5], 0
    %11 = vsyncpa [#allocation8], 0
    %12 = vsyncpa [#allocation10], 0
    %13 = vsyncpa [#allocation4], 0
    // Predicated region
    $region2: #{tpu_custom_call.1} parent=1 // pred_check
      _
    $region3: #{tpu_custom_call.1} parent=1 // pred_check_branch
      %15 = sbr.rel (0) target = $region5
    $region4: #{tpu_custom_call.1} parent=1 // pred_region
      %s17 = ssub.s32 1024, 1024
      %18 = vsyncadd [#allocation3], %s17
      %s19 = sshll.u32 [#allocation2], 4
      %s20 = int_to_ptr.vmem [resolvable:$true] %s19
      %25 = dma.hbm_to_vmem [thread:$0]  %s0, 1024, %s20, [#allocation3], 128, 128, 8
    $region5: #{tpu_custom_call.1} parent=1 // pred_fallthru
      _
    // Predicated region
    $region6: #{tpu_custom_call.1} parent=1 // pred_check
      _
    $region7: #{tpu_custom_call.1} parent=1 // pred_check_branch
      %27 = sbr.rel (0) target = $region9
    $region8: #{tpu_custom_call.1} parent=1 // pred_region
      %s29 = ssub.s32 16, 16
      %30 = vsyncadd [#allocation5], %s29
      %s32 = sshll.u32 %s1, 4
      %s33 = int_to_ptr.vmem [resolvable:$true] %s32
      %35 = dma.vmem_to_smem %s33, 16, [#allocation6], [#allocation5]
    $region9: #{tpu_custom_call.1} parent=1 // pred_fallthru
      _
    // Predicated region
    $region10: #{tpu_custom_call.1} parent=1 // pred_check
      _
    $region11: #{tpu_custom_call.1} parent=1 // pred_check_branch
      %37 = sbr.rel (0) target = $region13
    $region12: #{tpu_custom_call.1} parent=1 // pred_region
      %s39 = ssub.s32 16, 16
      %40 = vsyncadd [#allocation8], %s39
      %s42 = sshll.u32 %s2, 4
      %s43 = int_to_ptr.vmem [resolvable:$true] %s42
      %45 = dma.vmem_to_smem %s43, 16, [#allocation7], [#allocation8]
    $region13: #{tpu_custom_call.1} parent=1 // pred_fallthru
      _
    // Predicated region
    $region14: #{tpu_custom_call.1} parent=1 // pred_check
      _
    $region15: #{tpu_custom_call.1} parent=1 // pred_check_branch
      %47 = sbr.rel (0) target = $region17
    $region16: #{tpu_custom_call.1} parent=1 // pred_region
      %s49 = ssub.s32 896, 896
      %50 = vsyncadd [#allocation10], %s49
      %s51 = sshll.u32 [#allocation9], 4
      %s52 = int_to_ptr.vmem [resolvable:$true] %s51
      %57 = dma.hbm_to_vmem [thread:$0]  %s3, 896, %s52, [#allocation10], 448, 448, 28
    $region17: #{tpu_custom_call.1} parent=1 // pred_fallthru
      _
    // Predicated region
    $region18: #{tpu_custom_call.1} parent=1 // pred_check
      _
    $region19: #{tpu_custom_call.1} parent=1 // pred_check_branch
      %59 = sbr.rel (0) target = $region21
    $region20: #{tpu_custom_call.1} parent=1 // pred_region
      %60 = dma.done [#allocation3], 1024
    $region21: #{tpu_custom_call.1} parent=1 // pred_fallthru
      _
    // Predicated region
    $region22: #{tpu_custom_call.1} parent=1 // pred_check
      _
    $region23: #{tpu_custom_call.1} parent=1 // pred_check_branch
      %62 = sbr.rel (0) target = $region25
    $region24: #{tpu_custom_call.1} parent=1 // pred_region
      %63 = dma.done [#allocation5], 16
    $region25: #{tpu_custom_call.1} parent=1 // pred_fallthru
      _
    // Predicated region
    $region26: #{tpu_custom_call.1} parent=1 // pred_check
      _
    $region27: #{tpu_custom_call.1} parent=1 // pred_check_branch
      %65 = sbr.rel (0) target = $region29
    $region28: #{tpu_custom_call.1} parent=1 // pred_region
      %66 = dma.done [#allocation8], 16
    $region29: #{tpu_custom_call.1} parent=1 // pred_fallthru
      _
    // Predicated region
    $region30: #{tpu_custom_call.1} parent=1 // pred_check
      _
    $region31: #{tpu_custom_call.1} parent=1 // pred_check_branch
      %68 = sbr.rel (0) target = $region33
    $region32: #{tpu_custom_call.1} parent=1 // pred_region
      %69 = dma.done [#allocation10], 896
    $region33: #{tpu_custom_call.1} parent=1 // pred_fallthru
      _
    %70 = sfence
    %v72 = vld [vmem:[#allocation2] sm:$0xff]
    %v73 = vld [vmem:[#allocation2 + $0x8] sm:$0xff]
    %s74 = scalar_lea.vmem [#allocation2], 16
    %v75 = vld [vmem:[%s74] sm:$0xff]
    %v76 = vld [vmem:[%s74 + $0x8] sm:$0xff]
    %s77 = scalar_lea.vmem [#allocation2], 32
    %v78 = vld [vmem:[%s77] sm:$0xff]
    %v79 = vld [vmem:[%s77 + $0x8] sm:$0xff]
    %s80 = scalar_lea.vmem [#allocation2], 48
    %v81 = vld [vmem:[%s80] sm:$0xff]
    %v82 = vld [vmem:[%s80 + $0x8] sm:$0xff]
    %s83 = sld [smem:[#allocation6]]
    %v84 = vstv %s83
    %v85 = vmul.f32 %v72, %v84
    %v86 = vmul.f32 %v73, %v84
    %s87 = sld [smem:[#allocation6 + $0x1]]
    %v88 = vstv %s87
    %v89 = vmul.f32 %v75, %v88
    %v90 = vmul.f32 %v76, %v88
    %v91 = vadd.f32 %v85, %v89
    %v92 = vadd.f32 %v86, %v90
    %s93 = sld [smem:[#allocation6 + $0x2]]
    %v94 = vstv %s93
    %v95 = vmul.f32 %v78, %v94
    %v96 = vmul.f32 %v79, %v94
    %v97 = vadd.f32 %v91, %v95
    %v98 = vadd.f32 %v92, %v96
    %s99 = sld [smem:[#allocation6 + $0x3]]
    %v100 = vstv %s99
    %v101 = vmul.f32 %v81, %v100
    %v102 = vmul.f32 %v82, %v100
    %v103 = vadd.f32 %v97, %v101
    %v104 = vadd.f32 %v98, %v102
    %s105 = sld [smem:[#allocation7]]
    %v106 = vstv %s105
    %v107 = vadd.f32 %v103, %v106
    %v108 = vadd.f32 %v104, %v106
    %s109 = sld [smem:[#allocation6 + $0x4]]
    %v110 = vstv %s109
    %v111 = vmul.f32 %v72, %v110
    %v112 = vmul.f32 %v73, %v110
    %s113 = sld [smem:[#allocation6 + $0x5]]
    %v114 = vstv %s113
    %v115 = vmul.f32 %v75, %v114
    %v116 = vmul.f32 %v76, %v114
    %v117 = vadd.f32 %v111, %v115
    %v118 = vadd.f32 %v112, %v116
    %s119 = sld [smem:[#allocation6 + $0x6]]
    %v120 = vstv %s119
    %v121 = vmul.f32 %v78, %v120
    %v122 = vmul.f32 %v79, %v120
    %v123 = vadd.f32 %v117, %v121
    %v124 = vadd.f32 %v118, %v122
    %s125 = sld [smem:[#allocation6 + $0x7]]
    %v126 = vstv %s125
    %v127 = vmul.f32 %v81, %v126
    %v128 = vmul.f32 %v82, %v126
    %v129 = vadd.f32 %v123, %v127
    %v130 = vadd.f32 %v124, %v128
    %s131 = sld [smem:[#allocation7 + $0x1]]
    %v132 = vstv %s131
    %v133 = vadd.f32 %v129, %v132
    %v134 = vadd.f32 %v130, %v132
    %vm135 = vcmp.gt.f32.partialorder %v133, %v107
    %vm136 = vcmp.gt.f32.partialorder %v134, %v108
    %v137 = vsel %vm135, %v133, %v107
    %v138 = vsel %vm136, %v134, %v108
    %v139 = vsel %vm135, 1.0, 0.0
    %v140 = vsel %vm136, 1.0, 0.0
    %s141 = sld [smem:[#allocation6 + $0x8]]
    %v142 = vstv %s141
    %v143 = vmul.f32 %v72, %v142
    %v144 = vmul.f32 %v73, %v142
    %s145 = sld [smem:[#allocation6 + $0x9]]
    %v146 = vstv %s145
    %v147 = vmul.f32 %v75, %v146
    %v148 = vmul.f32 %v76, %v146
    %v149 = vadd.f32 %v143, %v147
    %v150 = vadd.f32 %v144, %v148
    %s151 = sld [smem:[#allocation6 + $0xa]]
    %v152 = vstv %s151
    %v153 = vmul.f32 %v78, %v152
    %v154 = vmul.f32 %v79, %v152
    %v155 = vadd.f32 %v149, %v153
    %v156 = vadd.f32 %v150, %v154
    %s157 = sld [smem:[#allocation6 + $0xb]]
    %v158 = vstv %s157
    %v159 = vmul.f32 %v81, %v158
    %v160 = vmul.f32 %v82, %v158
    %v161 = vadd.f32 %v155, %v159
    %v162 = vadd.f32 %v156, %v160
    %s163 = sld [smem:[#allocation7 + $0x2]]
    %v164 = vstv %s163
    %v165 = vadd.f32 %v161, %v164
    %v166 = vadd.f32 %v162, %v164
    %vm167 = vcmp.gt.f32.partialorder %v165, %v137
    %vm168 = vcmp.gt.f32.partialorder %v166, %v138
    %v169 = vsel %vm167, %v165, %v137
    %v170 = vsel %vm168, %v166, %v138
    %v171 = vsel %vm167, 2.0, %v139
    %v172 = vsel %vm168, 2.0, %v140
    %s173 = sld [smem:[#allocation6 + $0xc]]
    %v174 = vstv %s173
    %v175 = vmul.f32 %v72, %v174
    %v176 = vmul.f32 %v73, %v174
    %s177 = sld [smem:[#allocation6 + $0xd]]
    %v178 = vstv %s177
    %v179 = vmul.f32 %v75, %v178
    %v180 = vmul.f32 %v76, %v178
    %v181 = vadd.f32 %v175, %v179
    %v182 = vadd.f32 %v176, %v180
    %s183 = sld [smem:[#allocation6 + $0xe]]
    %v184 = vstv %s183
    %v185 = vmul.f32 %v78, %v184
    %v186 = vmul.f32 %v79, %v184
    %v187 = vadd.f32 %v181, %v185
    %v188 = vadd.f32 %v182, %v186
    %s189 = sld [smem:[#allocation6 + $0xf]]
    %v190 = vstv %s189
    %v191 = vmul.f32 %v81, %v190
    %v192 = vmul.f32 %v82, %v190
    %v193 = vadd.f32 %v187, %v191
    %v194 = vadd.f32 %v188, %v192
    %s195 = sld [smem:[#allocation7 + $0x3]]
    %v196 = vstv %s195
    %v197 = vadd.f32 %v193, %v196
    %v198 = vadd.f32 %v194, %v196
    %vm199 = vcmp.gt.f32.partialorder %v197, %v169
    %vm200 = vcmp.gt.f32.partialorder %v198, %v170
    %v201 = vsel %vm199, %v197, %v169
    %v202 = vsel %vm200, %v198, %v170
    %v203 = vsel %vm199, 3.0, %v171
    %v204 = vsel %vm200, 3.0, %v172
    %s205 = sld [smem:[#allocation6 + $0x10]]
    %v206 = vstv %s205
    %v207 = vmul.f32 %v72, %v206
    %v208 = vmul.f32 %v73, %v206
    %s209 = sld [smem:[#allocation6 + $0x11]]
    %v210 = vstv %s209
    %v211 = vmul.f32 %v75, %v210
    %v212 = vmul.f32 %v76, %v210
    %v213 = vadd.f32 %v207, %v211
    %v214 = vadd.f32 %v208, %v212
    %s215 = sld [smem:[#allocation6 + $0x12]]
    %v216 = vstv %s215
    %v217 = vmul.f32 %v78, %v216
    %v218 = vmul.f32 %v79, %v216
    %v219 = vadd.f32 %v213, %v217
    %v220 = vadd.f32 %v214, %v218
    %s221 = sld [smem:[#allocation6 + $0x13]]
    %v222 = vstv %s221
    %v223 = vmul.f32 %v81, %v222
    %v224 = vmul.f32 %v82, %v222
    %v225 = vadd.f32 %v219, %v223
    %v226 = vadd.f32 %v220, %v224
    %s227 = sld [smem:[#allocation7 + $0x4]]
    %v228 = vstv %s227
    %v229 = vadd.f32 %v225, %v228
    %v230 = vadd.f32 %v226, %v228
    %vm231 = vcmp.gt.f32.partialorder %v229, %v201
    %vm232 = vcmp.gt.f32.partialorder %v230, %v202
    %v233 = vsel %vm231, 4.0, %v203
    %v234 = vsel %vm232, 4.0, %v204
    %v235 = vpack.c.bf16 %v234, %v233
    %v236 = vld [vmem:[#allocation9] sm:$0xff]
    %v237 = vld [vmem:[#allocation9 + $0x8] sm:$0xff]
    %v238 = vld [vmem:[#allocation9 + $0x10] sm:$0xff]
    %v239 = vld [vmem:[#allocation9 + $0x18] sm:$0xf]
    %v240 = vld [vmem:[#allocation9 + $0x1c] sm:$0xff]
    %v241 = vld [vmem:[#allocation9 + $0x24] sm:$0xff]
    %v242 = vld [vmem:[#allocation9 + $0x2c] sm:$0xff]
    %v243 = vld [vmem:[#allocation9 + $0x34] sm:$0xf]
    %v252 = vunpack.c.l.b16 %v236
    %v253 = vunpack.c.h.b16 %v236
    %v254 = vunpack.c.l.b16 %v237
    %v255 = vunpack.c.h.b16 %v237
    %v256 = vunpack.c.l.b16 %v238
    %v257 = vunpack.c.h.b16 %v238
    %v258 = vunpack.c.l.b16 %v239
    %v259 = vunpack.c.l.b16 %v240
    %v260 = vunpack.c.h.b16 %v240
    %v261 = vunpack.c.l.b16 %v241
    %v262 = vunpack.c.h.b16 %v241
    %v263 = vunpack.c.l.b16 %v242
    %v264 = vunpack.c.h.b16 %v242
    %v265 = vunpack.c.l.b16 %v243
    %v266 = vpack.c.b16 %v259, %v252
    %v267 = vpack.c.b16 %v260, %v253
    %v268 = vpack.c.b16 %v261, %v254
    %v269 = vpack.c.b16 %v262, %v255
    %v270 = vpack.c.b16 %v263, %v256
    %v271 = vpack.c.b16 %v264, %v257
    %v272 = vpack.c.b16 %v265, %v258
    %vm280 = vcmask 130048
    %v282 = vsel %vm280, %v235, 0
    %284 = vmatprep.subr.bf16.mxu0 %v267
    %285 = vmatpush1.bf16.msra.mxu0 %v266
    %286 = vmatprep.subr.bf16.mxu0 0
    %287 = vmatpush1.bf16.msra.mxu0 0
    %288 = vmatprep.subr.bf16.mxu0 0
    %289 = vmatpush1.bf16.msra.mxu0 0
    %290 = vmatprep.subr.bf16.mxu0 0
    %291 = vmatpush1.bf16.msra.mxu0 0
    %292 = vmatprep.subr.bf16.mxu0 0
    %293 = vmatpush1.bf16.msra.mxu0 0
    %294 = vmatprep.subr.bf16.mxu0 0
    %295 = vmatpush1.bf16.msra.mxu0 0
    %296 = vmatprep.subr.bf16.mxu0 0
    %297 = vmatpush1.bf16.msra.mxu0 0
    %298 = vmatprep.subr.bf16.mxu0 0
    %299 = vmatpush1.bf16.msra.mxu0 0
    %300 = vmatprep.subr.bf16.mxu0 0
    %301 = vmatpush1.bf16.msra.mxu0 0
    %302 = vmatprep.subr.bf16.mxu0 0
    %303 = vmatpush1.bf16.msra.mxu0 0
    %304 = vmatprep.subr.bf16.mxu0 0
    %305 = vmatpush1.bf16.msra.mxu0 0
    %306 = vmatprep.subr.bf16.mxu0 0
    %307 = vmatpush1.bf16.msra.mxu0 0
    %308 = vmatprep.subr.bf16.mxu0 0
    %309 = vmatpush1.bf16.msra.mxu0 0
    %310 = vmatprep.subr.bf16.mxu0 0
    %311 = vmatpush1.bf16.msra.mxu0 0
    %312 = vmatprep.subr.bf16.mxu0 0
    %313 = vmatpush1.bf16.msra.mxu0 0
    %314 = vmatprep.subr.bf16.mxu0 0
    %315 = vmatpush1.bf16.msra.mxu0 0
    %316 = vmatprep.mubr.bf16.mxu0 0
    %317 = vmatmul.mubr.bf16.gmra.mrb[0].mxu0 %v282
    %v318 = vpop.f32.mrb[0].mxu0
    %v319 = vadd.f32 0.0, %v318
    %v320 = vpop.f32.mrb[0].mxu0
    %v321 = vadd.f32 0.0, %v320
    %v322 = vpop.f32.mrb[0].mxu0
    %v323 = vadd.f32 0.0, %v322
    %v324 = vpop.f32.mrb[0].mxu0
    %v325 = vadd.f32 0.0, %v324
    %326 = vdwg.mxu0
    %327 = vmatprep.subr.bf16.mxu0 %v269
    %328 = vmatpush1.bf16.msra.mxu0 %v268
    %329 = vmatprep.subr.bf16.mxu0 0
    %330 = vmatpush1.bf16.msra.mxu0 0
    %331 = vmatprep.subr.bf16.mxu0 0
    %332 = vmatpush1.bf16.msra.mxu0 0
    %333 = vmatprep.subr.bf16.mxu0 0
    %334 = vmatpush1.bf16.msra.mxu0 0
    %335 = vmatprep.subr.bf16.mxu0 0
    %336 = vmatpush1.bf16.msra.mxu0 0
    %337 = vmatprep.subr.bf16.mxu0 0
    %338 = vmatpush1.bf16.msra.mxu0 0
    %339 = vmatprep.subr.bf16.mxu0 0
    %340 = vmatpush1.bf16.msra.mxu0 0
    %341 = vmatprep.subr.bf16.mxu0 0
    %342 = vmatpush1.bf16.msra.mxu0 0
    %343 = vmatprep.subr.bf16.mxu0 0
    %344 = vmatpush1.bf16.msra.mxu0 0
    %345 = vmatprep.subr.bf16.mxu0 0
    %346 = vmatpush1.bf16.msra.mxu0 0
    %347 = vmatprep.subr.bf16.mxu0 0
    %348 = vmatpush1.bf16.msra.mxu0 0
    %349 = vmatprep.subr.bf16.mxu0 0
    %350 = vmatpush1.bf16.msra.mxu0 0
    %351 = vmatprep.subr.bf16.mxu0 0
    %352 = vmatpush1.bf16.msra.mxu0 0
    %353 = vmatprep.subr.bf16.mxu0 0
    %354 = vmatpush1.bf16.msra.mxu0 0
    %355 = vmatprep.subr.bf16.mxu0 0
    %356 = vmatpush1.bf16.msra.mxu0 0
    %357 = vmatprep.subr.bf16.mxu0 0
    %358 = vmatpush1.bf16.msra.mxu0 0
    %359 = vmatprep.mubr.bf16.mxu0 0
    %360 = vmatmul.mubr.bf16.gmra.mrb[0].mxu0 %v282
    %v361 = vpop.f32.mrb[0].mxu0
    %v362 = vadd.f32 0.0, %v361
    %v363 = vpop.f32.mrb[0].mxu0
    %v364 = vadd.f32 0.0, %v363
    %v365 = vpop.f32.mrb[0].mxu0
    %v366 = vadd.f32 0.0, %v365
    %v367 = vpop.f32.mrb[0].mxu0
    %v368 = vadd.f32 0.0, %v367
    %369 = vdwg.mxu0
    %370 = vmatprep.subr.bf16.mxu0 %v271
    %371 = vmatpush1.bf16.msra.mxu0 %v270
    %372 = vmatprep.subr.bf16.mxu0 0
    %373 = vmatpush1.bf16.msra.mxu0 0
    %374 = vmatprep.subr.bf16.mxu0 0
    %375 = vmatpush1.bf16.msra.mxu0 0
    %376 = vmatprep.subr.bf16.mxu0 0
    %377 = vmatpush1.bf16.msra.mxu0 0
    %378 = vmatprep.subr.bf16.mxu0 0
    %379 = vmatpush1.bf16.msra.mxu0 0
    %380 = vmatprep.subr.bf16.mxu0 0
    %381 = vmatpush1.bf16.msra.mxu0 0
    %382 = vmatprep.subr.bf16.mxu0 0
    %383 = vmatpush1.bf16.msra.mxu0 0
    %384 = vmatprep.subr.bf16.mxu0 0
    %385 = vmatpush1.bf16.msra.mxu0 0
    %386 = vmatprep.subr.bf16.mxu0 0
    %387 = vmatpush1.bf16.msra.mxu0 0
    %388 = vmatprep.subr.bf16.mxu0 0
    %389 = vmatpush1.bf16.msra.mxu0 0
    %390 = vmatprep.subr.bf16.mxu0 0
    %391 = vmatpush1.bf16.msra.mxu0 0
    %392 = vmatprep.subr.bf16.mxu0 0
    %393 = vmatpush1.bf16.msra.mxu0 0
    %394 = vmatprep.subr.bf16.mxu0 0
    %395 = vmatpush1.bf16.msra.mxu0 0
    %396 = vmatprep.subr.bf16.mxu0 0
    %397 = vmatpush1.bf16.msra.mxu0 0
    %398 = vmatprep.subr.bf16.mxu0 0
    %399 = vmatpush1.bf16.msra.mxu0 0
    %400 = vmatprep.subr.bf16.mxu0 0
    %401 = vmatpush1.bf16.msra.mxu0 0
    %402 = vmatprep.mubr.bf16.mxu0 0
    %403 = vmatmul.mubr.bf16.gmra.mrb[0].mxu0 %v282
    %v404 = vpop.f32.mrb[0].mxu0
    %v405 = vadd.f32 0.0, %v404
    %v406 = vpop.f32.mrb[0].mxu0
    %v407 = vadd.f32 0.0, %v406
    %v408 = vpop.f32.mrb[0].mxu0
    %v409 = vadd.f32 0.0, %v408
    %v410 = vpop.f32.mrb[0].mxu0
    %v411 = vadd.f32 0.0, %v410
    %412 = vdwg.mxu0
    %413 = vmatprep.subr.bf16.mxu0 0
    %414 = vmatpush1.bf16.msra.mxu0 %v272
    %415 = vmatprep.subr.bf16.mxu0 0
    %416 = vmatpush1.bf16.msra.mxu0 0
    %417 = vmatprep.subr.bf16.mxu0 0
    %418 = vmatpush1.bf16.msra.mxu0 0
    %419 = vmatprep.subr.bf16.mxu0 0
    %420 = vmatpush1.bf16.msra.mxu0 0
    %421 = vmatprep.subr.bf16.mxu0 0
    %422 = vmatpush1.bf16.msra.mxu0 0
    %423 = vmatprep.subr.bf16.mxu0 0
    %424 = vmatpush1.bf16.msra.mxu0 0
    %425 = vmatprep.subr.bf16.mxu0 0
    %426 = vmatpush1.bf16.msra.mxu0 0
    %427 = vmatprep.subr.bf16.mxu0 0
    %428 = vmatpush1.bf16.msra.mxu0 0
    %429 = vmatprep.subr.bf16.mxu0 0
    %430 = vmatpush1.bf16.msra.mxu0 0
    %431 = vmatprep.subr.bf16.mxu0 0
    %432 = vmatpush1.bf16.msra.mxu0 0
    %433 = vmatprep.subr.bf16.mxu0 0
    %434 = vmatpush1.bf16.msra.mxu0 0
    %435 = vmatprep.subr.bf16.mxu0 0
    %436 = vmatpush1.bf16.msra.mxu0 0
    %437 = vmatprep.subr.bf16.mxu0 0
    %438 = vmatpush1.bf16.msra.mxu0 0
    %439 = vmatprep.subr.bf16.mxu0 0
    %440 = vmatpush1.bf16.msra.mxu0 0
    %441 = vmatprep.subr.bf16.mxu0 0
    %442 = vmatpush1.bf16.msra.mxu0 0
    %443 = vmatprep.subr.bf16.mxu0 0
    %444 = vmatpush1.bf16.msra.mxu0 0
    %445 = vmatprep.mubr.bf16.mxu0 0
    %446 = vmatmul.mubr.bf16.gmra.mrb[0].mxu0 %v282
    %v447 = vpop.f32.mrb[0].mxu0
    %v448 = vadd.f32 0.0, %v447
    %v449 = vpop.f32.mrb[0].mxu0
    %v450 = vpop.f32.mrb[0].mxu0
    %v451 = vadd.f32 0.0, %v450
    %v452 = vpop.f32.mrb[0].mxu0
    %453 = vdwg.mxu0
    %v454 = vcvt.f32.s32.to.zero.pseudo %v319
    %v455 = vcvt.f32.s32.to.zero.pseudo %v321
    %v456 = vcvt.f32.s32.to.zero.pseudo %v362
    %v457 = vcvt.f32.s32.to.zero.pseudo %v364
    %v458 = vcvt.f32.s32.to.zero.pseudo %v405
    %v459 = vcvt.f32.s32.to.zero.pseudo %v407
    %v460 = vcvt.f32.s32.to.zero.pseudo %v448
    %v461 = vcvt.f32.s32.to.zero.pseudo %v323
    %v462 = vcvt.f32.s32.to.zero.pseudo %v325
    %v463 = vcvt.f32.s32.to.zero.pseudo %v366
    %v464 = vcvt.f32.s32.to.zero.pseudo %v368
    %v465 = vcvt.f32.s32.to.zero.pseudo %v409
    %v466 = vcvt.f32.s32.to.zero.pseudo %v411
    %v467 = vcvt.f32.s32.to.zero.pseudo %v451
    %v468 = vlaneseq
    %v469 = vshrl.u32 %v468, 7
    %v470 = vadd.s32 %v469, 8
    %v471 = vadd.s32 %v469, 16
    %v472 = vadd.s32 %v469, 24
    %v473 = vlaneseq
    %v474 = vshrl.u32 %v473, 7
    %v475 = vsub.s32 0, %v474
    %v476 = vrot.slane %v454, %v475
    %v477 = vlaneseq
    %v478 = vshrl.u32 %v477, 7
    %v479 = vsub.s32 0, %v478
    %v480 = vrot.slane %v455, %v479
    %v481 = vlaneseq
    %v482 = vshrl.u32 %v481, 7
    %v483 = vsub.s32 0, %v482
    %v484 = vrot.slane %v456, %v483
    %v485 = vlaneseq
    %v486 = vshrl.u32 %v485, 7
    %v487 = vsub.s32 0, %v486
    %v488 = vrot.slane %v457, %v487
    %v489 = vlaneseq
    %v490 = vshrl.u32 %v489, 7
    %v491 = vsub.s32 0, %v490
    %v492 = vrot.slane %v458, %v491
    %v493 = vlaneseq
    %v494 = vshrl.u32 %v493, 7
    %v495 = vsub.s32 0, %v494
    %v496 = vrot.slane %v459, %v495
    %v497 = vlaneseq
    %v498 = vshrl.u32 %v497, 7
    %v499 = vsub.s32 0, %v498
    %v500 = vrot.slane %v460, %v499
    %v501 = vlaneseq
    %v502 = vshrl.u32 %v501, 7
    %v503 = vsub.s32 1, %v502
    %v504 = vrot.slane %v454, %v503
    %v505 = vlaneseq
    %v506 = vshrl.u32 %v505, 7
    %v507 = vsub.s32 1, %v506
    %v508 = vrot.slane %v455, %v507
    %v509 = vlaneseq
    %v510 = vshrl.u32 %v509, 7
    %v511 = vsub.s32 1, %v510
    %v512 = vrot.slane %v456, %v511
    %v513 = vlaneseq
    %v514 = vshrl.u32 %v513, 7
    %v515 = vsub.s32 1, %v514
    %v516 = vrot.slane %v457, %v515
    %v517 = vlaneseq
    %v518 = vshrl.u32 %v517, 7
    %v519 = vsub.s32 1, %v518
    %v520 = vrot.slane %v458, %v519
    %v521 = vlaneseq
    %v522 = vshrl.u32 %v521, 7
    %v523 = vsub.s32 1, %v522
    %v524 = vrot.slane %v459, %v523
    %v525 = vlaneseq
    %v526 = vshrl.u32 %v525, 7
    %v527 = vsub.s32 1, %v526
    %v528 = vrot.slane %v460, %v527
    %vm529 = vcmp.lt.s32.totalorder %v469, 30
    %vm530 = vcmp.lt.s32.totalorder %v470, 30
    %vm531 = vcmp.lt.s32.totalorder %v471, 30
    %vm532 = vcmp.lt.s32.totalorder %v472, 30
    %v533 = vsel %vm529, %v476, %v504
    %v534 = vsel %vm529, %v480, %v508
    %v535 = vsel %vm529, %v484, %v512
    %v536 = vsel %vm529, %v488, %v516
    %v537 = vsel %vm529, %v492, %v520
    %v538 = vsel %vm529, %v496, %v524
    %v539 = vsel %vm529, %v500, %v528
    %v540 = vsel %vm530, %v476, %v504
    %v541 = vsel %vm530, %v480, %v508
    %v542 = vsel %vm530, %v484, %v512
    %v543 = vsel %vm530, %v488, %v516
    %v544 = vsel %vm530, %v492, %v520
    %v545 = vsel %vm530, %v496, %v524
    %v546 = vsel %vm530, %v500, %v528
    %v547 = vsel %vm531, %v476, %v504
    %v548 = vsel %vm531, %v480, %v508
    %v549 = vsel %vm531, %v484, %v512
    %v550 = vsel %vm531, %v488, %v516
    %v551 = vsel %vm531, %v492, %v520
    %v552 = vsel %vm531, %v496, %v524
    %v553 = vsel %vm531, %v500, %v528
    %v554 = vsel %vm532, %v476, %v504
    %v555 = vsel %vm532, %v480, %v508
    %v556 = vsel %vm532, %v484, %v512
    %v557 = vsel %vm532, %v488, %v516
    %v558 = vsel %vm532, %v492, %v520
    %v559 = vsel %vm532, %v496, %v524
    %v560 = vsel %vm532, %v500, %v528
    %v561 = vpack.c.b16 %v540, %v533
    %v562 = vpack.c.b16 %v554, %v547
    %v563 = vpack.c.b8 %v562, %v561
    %v564 = vpack.c.b16 %v541, %v534
    %v565 = vpack.c.b16 %v555, %v548
    %v566 = vpack.c.b8 %v565, %v564
    %v567 = vpack.c.b16 %v542, %v535
    %v568 = vpack.c.b16 %v556, %v549
    %v569 = vpack.c.b8 %v568, %v567
    %v570 = vpack.c.b16 %v543, %v536
    %v571 = vpack.c.b16 %v557, %v550
    %v572 = vpack.c.b8 %v571, %v570
    %v573 = vpack.c.b16 %v544, %v537
    %v574 = vpack.c.b16 %v558, %v551
    %v575 = vpack.c.b8 %v574, %v573
    %v576 = vpack.c.b16 %v545, %v538
    %v577 = vpack.c.b16 %v559, %v552
    %v578 = vpack.c.b8 %v577, %v576
    %v579 = vpack.c.b16 %v546, %v539
    %v580 = vpack.c.b16 %v560, %v553
    %v581 = vpack.c.b8 %v580, %v579
    %582 = vst [vmem:[#allocation11] sm:$0xff] %v563
    %583 = vst [vmem:[#allocation11 + $0x8] sm:$0xff] %v566
    %584 = vst [vmem:[#allocation11 + $0x10] sm:$0xff] %v569
    %585 = vst [vmem:[#allocation11 + $0x18] sm:$0xff] %v572
    %586 = vst [vmem:[#allocation11 + $0x20] sm:$0xff] %v575
    %587 = vst [vmem:[#allocation11 + $0x28] sm:$0xff] %v578
    %vm588 = vcmask 654336
    %589 = vst.msk [vmem:[#allocation11 + $0x30] sm:$0xff] %vm588, %v581
    %v590 = vlaneseq
    %v591 = vshrl.u32 %v590, 7
    %v592 = vsub.s32 2, %v591
    %v593 = vrot.slane %v454, %v592
    %v594 = vlaneseq
    %v595 = vshrl.u32 %v594, 7
    %v596 = vsub.s32 2, %v595
    %v597 = vrot.slane %v455, %v596
    %v598 = vlaneseq
    %v599 = vshrl.u32 %v598, 7
    %v600 = vsub.s32 2, %v599
    %v601 = vrot.slane %v456, %v600
    %v602 = vlaneseq
    %v603 = vshrl.u32 %v602, 7
    %v604 = vsub.s32 2, %v603
    %v605 = vrot.slane %v457, %v604
    %v606 = vlaneseq
    %v607 = vshrl.u32 %v606, 7
    %v608 = vsub.s32 2, %v607
    %v609 = vrot.slane %v458, %v608
    %v610 = vlaneseq
    %v611 = vshrl.u32 %v610, 7
    %v612 = vsub.s32 2, %v611
    %v613 = vrot.slane %v459, %v612
    %v614 = vlaneseq
    %v615 = vshrl.u32 %v614, 7
    %v616 = vsub.s32 2, %v615
    %v617 = vrot.slane %v460, %v616
    %vm618 = vcmp.lt.s32.totalorder %v469, 28
    %vm619 = vcmp.lt.s32.totalorder %v470, 28
    %vm620 = vcmp.lt.s32.totalorder %v471, 28
    %vm621 = vcmp.lt.s32.totalorder %v472, 28
    %v622 = vsel %vm618, %v504, %v593
    %v623 = vsel %vm618, %v508, %v597
    %v624 = vsel %vm618, %v512, %v601
    %v625 = vsel %vm618, %v516, %v605
    %v626 = vsel %vm618, %v520, %v609
    %v627 = vsel %vm618, %v524, %v613
    %v628 = vsel %vm618, %v528, %v617
    %v629 = vsel %vm619, %v504, %v593
    %v630 = vsel %vm619, %v508, %v597
    %v631 = vsel %vm619, %v512, %v601
    %v632 = vsel %vm619, %v516, %v605
    %v633 = vsel %vm619, %v520, %v609
    %v634 = vsel %vm619, %v524, %v613
    %v635 = vsel %vm619, %v528, %v617
    %v636 = vsel %vm620, %v504, %v593
    %v637 = vsel %vm620, %v508, %v597
    %v638 = vsel %vm620, %v512, %v601
    %v639 = vsel %vm620, %v516, %v605
    %v640 = vsel %vm620, %v520, %v609
    %v641 = vsel %vm620, %v524, %v613
    %v642 = vsel %vm620, %v528, %v617
    %v643 = vsel %vm621, %v504, %v593
    %v644 = vsel %vm621, %v508, %v597
    %v645 = vsel %vm621, %v512, %v601
    %v646 = vsel %vm621, %v516, %v605
    %v647 = vsel %vm621, %v520, %v609
    %v648 = vsel %vm621, %v524, %v613
    %v649 = vsel %vm621, %v528, %v617
    %v650 = vpack.c.b16 %v629, %v622
    %v651 = vpack.c.b16 %v643, %v636
    %v652 = vpack.c.b8 %v651, %v650
    %v653 = vpack.c.b16 %v630, %v623
    %v654 = vpack.c.b16 %v644, %v637
    %v655 = vpack.c.b8 %v654, %v653
    %v656 = vpack.c.b16 %v631, %v624
    %v657 = vpack.c.b16 %v645, %v638
    %v658 = vpack.c.b8 %v657, %v656
    %v659 = vpack.c.b16 %v632, %v625
    %v660 = vpack.c.b16 %v646, %v639
    %v661 = vpack.c.b8 %v660, %v659
    %v662 = vpack.c.b16 %v633, %v626
    %v663 = vpack.c.b16 %v647, %v640
    %v664 = vpack.c.b8 %v663, %v662
    %v665 = vpack.c.b16 %v634, %v627
    %v666 = vpack.c.b16 %v648, %v641
    %v667 = vpack.c.b8 %v666, %v665
    %v668 = vpack.c.b16 %v635, %v628
    %v669 = vpack.c.b16 %v649, %v642
    %v670 = vpack.c.b8 %v669, %v668
    %671 = vst [vmem:[#allocation11 + $0x38] sm:$0xff] %v652
    %672 = vst [vmem:[#allocation11 + $0x40] sm:$0xff] %v655
    %673 = vst [vmem:[#allocation11 + $0x48] sm:$0xff] %v658
    %674 = vst [vmem:[#allocation11 + $0x50] sm:$0xff] %v661
    %675 = vst [vmem:[#allocation11 + $0x58] sm:$0xff] %v664
    %676 = vst [vmem:[#allocation11 + $0x60] sm:$0xff] %v667
    %677 = vst.msk [vmem:[#allocation11 + $0x68] sm:$0xff] %vm588, %v670
    %v678 = vlaneseq
    %v679 = vshrl.u32 %v678, 7
    %v680 = vsub.s32 3, %v679
    %v681 = vrot.slane %v454, %v680
    %v682 = vlaneseq
    %v683 = vshrl.u32 %v682, 7
    %v684 = vsub.s32 3, %v683
    %v685 = vrot.slane %v455, %v684
    %v686 = vlaneseq
    %v687 = vshrl.u32 %v686, 7
    %v688 = vsub.s32 3, %v687
    %v689 = vrot.slane %v456, %v688
    %v690 = vlaneseq
    %v691 = vshrl.u32 %v690, 7
    %v692 = vsub.s32 3, %v691
    %v693 = vrot.slane %v457, %v692
    %v694 = vlaneseq
    %v695 = vshrl.u32 %v694, 7
    %v696 = vsub.s32 3, %v695
    %v697 = vrot.slane %v458, %v696
    %v698 = vlaneseq
    %v699 = vshrl.u32 %v698, 7
    %v700 = vsub.s32 3, %v699
    %v701 = vrot.slane %v459, %v700
    %v702 = vlaneseq
    %v703 = vshrl.u32 %v702, 7
    %v704 = vsub.s32 3, %v703
    %v705 = vrot.slane %v460, %v704
    %vm706 = vcmp.lt.s32.totalorder %v469, 26
    %vm707 = vcmp.lt.s32.totalorder %v470, 26
    %vm708 = vcmp.lt.s32.totalorder %v471, 26
    %vm709 = vcmp.lt.s32.totalorder %v472, 26
    %v710 = vsel %vm706, %v593, %v681
    %v711 = vsel %vm706, %v597, %v685
    %v712 = vsel %vm706, %v601, %v689
    %v713 = vsel %vm706, %v605, %v693
    %v714 = vsel %vm706, %v609, %v697
    %v715 = vsel %vm706, %v613, %v701
    %v716 = vsel %vm706, %v617, %v705
    %v717 = vsel %vm707, %v593, %v681
    %v718 = vsel %vm707, %v597, %v685
    %v719 = vsel %vm707, %v601, %v689
    %v720 = vsel %vm707, %v605, %v693
    %v721 = vsel %vm707, %v609, %v697
    %v722 = vsel %vm707, %v613, %v701
    %v723 = vsel %vm707, %v617, %v705
    %v724 = vsel %vm708, %v593, %v681
    %v725 = vsel %vm708, %v597, %v685
    %v726 = vsel %vm708, %v601, %v689
    %v727 = vsel %vm708, %v605, %v693
    %v728 = vsel %vm708, %v609, %v697
    %v729 = vsel %vm708, %v613, %v701
    %v730 = vsel %vm708, %v617, %v705
    %v731 = vsel %vm709, %v593, %v681
    %v732 = vsel %vm709, %v597, %v685
    %v733 = vsel %vm709, %v601, %v689
    %v734 = vsel %vm709, %v605, %v693
    %v735 = vsel %vm709, %v609, %v697
    %v736 = vsel %vm709, %v613, %v701
    %v737 = vsel %vm709, %v617, %v705
    %v738 = vpack.c.b16 %v717, %v710
    %v739 = vpack.c.b16 %v731, %v724
    %v740 = vpack.c.b8 %v739, %v738
    %v741 = vpack.c.b16 %v718, %v711
    %v742 = vpack.c.b16 %v732, %v725
    %v743 = vpack.c.b8 %v742, %v741
    %v744 = vpack.c.b16 %v719, %v712
    %v745 = vpack.c.b16 %v733, %v726
    %v746 = vpack.c.b8 %v745, %v744
    %v747 = vpack.c.b16 %v720, %v713
    %v748 = vpack.c.b16 %v734, %v727
    %v749 = vpack.c.b8 %v748, %v747
    %v750 = vpack.c.b16 %v721, %v714
    %v751 = vpack.c.b16 %v735, %v728
    %v752 = vpack.c.b8 %v751, %v750
    %v753 = vpack.c.b16 %v722, %v715
    %v754 = vpack.c.b16 %v736, %v729
    %v755 = vpack.c.b8 %v754, %v753
    %v756 = vpack.c.b16 %v723, %v716
    %v757 = vpack.c.b16 %v737, %v730
    %v758 = vpack.c.b8 %v757, %v756
    %759 = vst [vmem:[#allocation11 + $0x70] sm:$0xff] %v740
    %760 = vst [vmem:[#allocation11 + $0x78] sm:$0xff] %v743
    %761 = vst [vmem:[#allocation11 + $0x80] sm:$0xff] %v746
    %762 = vst [vmem:[#allocation11 + $0x88] sm:$0xff] %v749
    %763 = vst [vmem:[#allocation11 + $0x90] sm:$0xff] %v752
    %764 = vst [vmem:[#allocation11 + $0x98] sm:$0xff] %v755
    %765 = vst.msk [vmem:[#allocation11 + $0xa0] sm:$0xff] %vm588, %v758
    %v766 = vlaneseq
    %v767 = vshrl.u32 %v766, 7
    %v768 = vsub.s32 4, %v767
    %v769 = vrot.slane %v454, %v768
    %v770 = vlaneseq
    %v771 = vshrl.u32 %v770, 7
    %v772 = vsub.s32 4, %v771
    %v773 = vrot.slane %v455, %v772
    %v774 = vlaneseq
    %v775 = vshrl.u32 %v774, 7
    %v776 = vsub.s32 4, %v775
    %v777 = vrot.slane %v456, %v776
    %v778 = vlaneseq
    %v779 = vshrl.u32 %v778, 7
    %v780 = vsub.s32 4, %v779
    %v781 = vrot.slane %v457, %v780
    %v782 = vlaneseq
    %v783 = vshrl.u32 %v782, 7
    %v784 = vsub.s32 4, %v783
    %v785 = vrot.slane %v458, %v784
    %v786 = vlaneseq
    %v787 = vshrl.u32 %v786, 7
    %v788 = vsub.s32 4, %v787
    %v789 = vrot.slane %v459, %v788
    %v790 = vlaneseq
    %v791 = vshrl.u32 %v790, 7
    %v792 = vsub.s32 4, %v791
    %v793 = vrot.slane %v460, %v792
    %vm794 = vcmp.lt.s32.totalorder %v469, 24
    %vm795 = vcmp.lt.s32.totalorder %v470, 24
    %vm796 = vcmp.lt.s32.totalorder %v471, 24
    %vm797 = vcmp.lt.s32.totalorder %v472, 24
    %v798 = vsel %vm794, %v681, %v769
    %v799 = vsel %vm794, %v685, %v773
    %v800 = vsel %vm794, %v689, %v777
    %v801 = vsel %vm794, %v693, %v781
    %v802 = vsel %vm794, %v697, %v785
    %v803 = vsel %vm794, %v701, %v789
    %v804 = vsel %vm794, %v705, %v793
    %v805 = vsel %vm795, %v681, %v769
    %v806 = vsel %vm795, %v685, %v773
    %v807 = vsel %vm795, %v689, %v777
    %v808 = vsel %vm795, %v693, %v781
    %v809 = vsel %vm795, %v697, %v785
    %v810 = vsel %vm795, %v701, %v789
    %v811 = vsel %vm795, %v705, %v793
    %v812 = vsel %vm796, %v681, %v769
    %v813 = vsel %vm796, %v685, %v773
    %v814 = vsel %vm796, %v689, %v777
    %v815 = vsel %vm796, %v693, %v781
    %v816 = vsel %vm796, %v697, %v785
    %v817 = vsel %vm796, %v701, %v789
    %v818 = vsel %vm796, %v705, %v793
    %v819 = vsel %vm797, %v681, %v769
    %v820 = vsel %vm797, %v685, %v773
    %v821 = vsel %vm797, %v689, %v777
    %v822 = vsel %vm797, %v693, %v781
    %v823 = vsel %vm797, %v697, %v785
    %v824 = vsel %vm797, %v701, %v789
    %v825 = vsel %vm797, %v705, %v793
    %v826 = vpack.c.b16 %v805, %v798
    %v827 = vpack.c.b16 %v819, %v812
    %v828 = vpack.c.b8 %v827, %v826
    %v829 = vpack.c.b16 %v806, %v799
    %v830 = vpack.c.b16 %v820, %v813
    %v831 = vpack.c.b8 %v830, %v829
    %v832 = vpack.c.b16 %v807, %v800
    %v833 = vpack.c.b16 %v821, %v814
    %v834 = vpack.c.b8 %v833, %v832
    %v835 = vpack.c.b16 %v808, %v801
    %v836 = vpack.c.b16 %v822, %v815
    %v837 = vpack.c.b8 %v836, %v835
    %v838 = vpack.c.b16 %v809, %v802
    %v839 = vpack.c.b16 %v823, %v816
    %v840 = vpack.c.b8 %v839, %v838
    %v841 = vpack.c.b16 %v810, %v803
    %v842 = vpack.c.b16 %v824, %v817
    %v843 = vpack.c.b8 %v842, %v841
    %v844 = vpack.c.b16 %v811, %v804
    %v845 = vpack.c.b16 %v825, %v818
    %v846 = vpack.c.b8 %v845, %v844
    %847 = vst [vmem:[#allocation11 + $0xa8] sm:$0xff] %v828
    %848 = vst [vmem:[#allocation11 + $0xb0] sm:$0xff] %v831
    %849 = vst [vmem:[#allocation11 + $0xb8] sm:$0xff] %v834
    %850 = vst [vmem:[#allocation11 + $0xc0] sm:$0xff] %v837
    %851 = vst [vmem:[#allocation11 + $0xc8] sm:$0xff] %v840
    %852 = vst [vmem:[#allocation11 + $0xd0] sm:$0xff] %v843
    %853 = vst.msk [vmem:[#allocation11 + $0xd8] sm:$0xff] %vm588, %v846
    %v854 = vlaneseq
    %v855 = vshrl.u32 %v854, 7
    %v856 = vsub.s32 5, %v855
    %v857 = vrot.slane %v454, %v856
    %v858 = vlaneseq
    %v859 = vshrl.u32 %v858, 7
    %v860 = vsub.s32 5, %v859
    %v861 = vrot.slane %v455, %v860
    %v862 = vlaneseq
    %v863 = vshrl.u32 %v862, 7
    %v864 = vsub.s32 5, %v863
    %v865 = vrot.slane %v456, %v864
    %v866 = vlaneseq
    %v867 = vshrl.u32 %v866, 7
    %v868 = vsub.s32 5, %v867
    %v869 = vrot.slane %v457, %v868
    %v870 = vlaneseq
    %v871 = vshrl.u32 %v870, 7
    %v872 = vsub.s32 5, %v871
    %v873 = vrot.slane %v458, %v872
    %v874 = vlaneseq
    %v875 = vshrl.u32 %v874, 7
    %v876 = vsub.s32 5, %v875
    %v877 = vrot.slane %v459, %v876
    %v878 = vlaneseq
    %v879 = vshrl.u32 %v878, 7
    %v880 = vsub.s32 5, %v879
    %v881 = vrot.slane %v460, %v880
    %vm882 = vcmp.lt.s32.totalorder %v469, 22
    %vm883 = vcmp.lt.s32.totalorder %v470, 22
    %vm884 = vcmp.lt.s32.totalorder %v471, 22
    %vm885 = vcmp.lt.s32.totalorder %v472, 22
    %v886 = vsel %vm882, %v769, %v857
    %v887 = vsel %vm882, %v773, %v861
    %v888 = vsel %vm882, %v777, %v865
    %v889 = vsel %vm882, %v781, %v869
    %v890 = vsel %vm882, %v785, %v873
    %v891 = vsel %vm882, %v789, %v877
    %v892 = vsel %vm882, %v793, %v881
    %v893 = vsel %vm883, %v769, %v857
    %v894 = vsel %vm883, %v773, %v861
    %v895 = vsel %vm883, %v777, %v865
    %v896 = vsel %vm883, %v781, %v869
    %v897 = vsel %vm883, %v785, %v873
    %v898 = vsel %vm883, %v789, %v877
    %v899 = vsel %vm883, %v793, %v881
    %v900 = vsel %vm884, %v769, %v857
    %v901 = vsel %vm884, %v773, %v861
    %v902 = vsel %vm884, %v777, %v865
    %v903 = vsel %vm884, %v781, %v869
    %v904 = vsel %vm884, %v785, %v873
    %v905 = vsel %vm884, %v789, %v877
    %v906 = vsel %vm884, %v793, %v881
    %v907 = vsel %vm885, %v769, %v857
    %v908 = vsel %vm885, %v773, %v861
    %v909 = vsel %vm885, %v777, %v865
    %v910 = vsel %vm885, %v781, %v869
    %v911 = vsel %vm885, %v785, %v873
    %v912 = vsel %vm885, %v789, %v877
    %v913 = vsel %vm885, %v793, %v881
    %v914 = vpack.c.b16 %v893, %v886
    %v915 = vpack.c.b16 %v907, %v900
    %v916 = vpack.c.b8 %v915, %v914
    %v917 = vpack.c.b16 %v894, %v887
    %v918 = vpack.c.b16 %v908, %v901
    %v919 = vpack.c.b8 %v918, %v917
    %v920 = vpack.c.b16 %v895, %v888
    %v921 = vpack.c.b16 %v909, %v902
    %v922 = vpack.c.b8 %v921, %v920
    %v923 = vpack.c.b16 %v896, %v889
    %v924 = vpack.c.b16 %v910, %v903
    %v925 = vpack.c.b8 %v924, %v923
    %v926 = vpack.c.b16 %v897, %v890
    %v927 = vpack.c.b16 %v911, %v904
    %v928 = vpack.c.b8 %v927, %v926
    %v929 = vpack.c.b16 %v898, %v891
    %v930 = vpack.c.b16 %v912, %v905
    %v931 = vpack.c.b8 %v930, %v929
    %v932 = vpack.c.b16 %v899, %v892
    %v933 = vpack.c.b16 %v913, %v906
    %v934 = vpack.c.b8 %v933, %v932
    %935 = vst [vmem:[#allocation11 + $0xe0] sm:$0xff] %v916
    %936 = vst [vmem:[#allocation11 + $0xe8] sm:$0xff] %v919
    %937 = vst [vmem:[#allocation11 + $0xf0] sm:$0xff] %v922
    %938 = vst [vmem:[#allocation11 + $0xf8] sm:$0xff] %v925
    %939 = vst [vmem:[#allocation11 + $0x100] sm:$0xff] %v928
    %940 = vst [vmem:[#allocation11 + $0x108] sm:$0xff] %v931
    %941 = vst.msk [vmem:[#allocation11 + $0x110] sm:$0xff] %vm588, %v934
    %v942 = vlaneseq
    %v943 = vshrl.u32 %v942, 7
    %v944 = vsub.s32 6, %v943
    %v945 = vrot.slane %v454, %v944
    %v946 = vlaneseq
    %v947 = vshrl.u32 %v946, 7
    %v948 = vsub.s32 6, %v947
    %v949 = vrot.slane %v455, %v948
    %v950 = vlaneseq
    %v951 = vshrl.u32 %v950, 7
    %v952 = vsub.s32 6, %v951
    %v953 = vrot.slane %v456, %v952
    %v954 = vlaneseq
    %v955 = vshrl.u32 %v954, 7
    %v956 = vsub.s32 6, %v955
    %v957 = vrot.slane %v457, %v956
    %v958 = vlaneseq
    %v959 = vshrl.u32 %v958, 7
    %v960 = vsub.s32 6, %v959
    %v961 = vrot.slane %v458, %v960
    %v962 = vlaneseq
    %v963 = vshrl.u32 %v962, 7
    %v964 = vsub.s32 6, %v963
    %v965 = vrot.slane %v459, %v964
    %v966 = vlaneseq
    %v967 = vshrl.u32 %v966, 7
    %v968 = vsub.s32 6, %v967
    %v969 = vrot.slane %v460, %v968
    %vm970 = vcmp.lt.s32.totalorder %v469, 20
    %vm971 = vcmp.lt.s32.totalorder %v470, 20
    %vm972 = vcmp.lt.s32.totalorder %v471, 20
    %vm973 = vcmp.lt.s32.totalorder %v472, 20
    %v974 = vsel %vm970, %v857, %v945
    %v975 = vsel %vm970, %v861, %v949
    %v976 = vsel %vm970, %v865, %v953
    %v977 = vsel %vm970, %v869, %v957
    %v978 = vsel %vm970, %v873, %v961
    %v979 = vsel %vm970, %v877, %v965
    %v980 = vsel %vm970, %v881, %v969
    %v981 = vsel %vm971, %v857, %v945
    %v982 = vsel %vm971, %v861, %v949
    %v983 = vsel %vm971, %v865, %v953
    %v984 = vsel %vm971, %v869, %v957
    %v985 = vsel %vm971, %v873, %v961
    %v986 = vsel %vm971, %v877, %v965
    %v987 = vsel %vm971, %v881, %v969
    %v988 = vsel %vm972, %v857, %v945
    %v989 = vsel %vm972, %v861, %v949
    %v990 = vsel %vm972, %v865, %v953
    %v991 = vsel %vm972, %v869, %v957
    %v992 = vsel %vm972, %v873, %v961
    %v993 = vsel %vm972, %v877, %v965
    %v994 = vsel %vm972, %v881, %v969
    %v995 = vsel %vm973, %v857, %v945
    %v996 = vsel %vm973, %v861, %v949
    %v997 = vsel %vm973, %v865, %v953
    %v998 = vsel %vm973, %v869, %v957
    %v999 = vsel %vm973, %v873, %v961
    %v1000 = vsel %vm973, %v877, %v965
    %v1001 = vsel %vm973, %v881, %v969
    %v1002 = vpack.c.b16 %v981, %v974
    %v1003 = vpack.c.b16 %v995, %v988
    %v1004 = vpack.c.b8 %v1003, %v1002
    %v1005 = vpack.c.b16 %v982, %v975
    %v1006 = vpack.c.b16 %v996, %v989
    %v1007 = vpack.c.b8 %v1006, %v1005
    %v1008 = vpack.c.b16 %v983, %v976
    %v1009 = vpack.c.b16 %v997, %v990
    %v1010 = vpack.c.b8 %v1009, %v1008
    %v1011 = vpack.c.b16 %v984, %v977
    %v1012 = vpack.c.b16 %v998, %v991
    %v1013 = vpack.c.b8 %v1012, %v1011
    %v1014 = vpack.c.b16 %v985, %v978
    %v1015 = vpack.c.b16 %v999, %v992
    %v1016 = vpack.c.b8 %v1015, %v1014
    %v1017 = vpack.c.b16 %v986, %v979
    %v1018 = vpack.c.b16 %v1000, %v993
    %v1019 = vpack.c.b8 %v1018, %v1017
    %v1020 = vpack.c.b16 %v987, %v980
    %v1021 = vpack.c.b16 %v1001, %v994
    %v1022 = vpack.c.b8 %v1021, %v1020
    %1023 = vst [vmem:[#allocation11 + $0x118] sm:$0xff] %v1004
    %1024 = vst [vmem:[#allocation11 + $0x120] sm:$0xff] %v1007
    %1025 = vst [vmem:[#allocation11 + $0x128] sm:$0xff] %v1010
    %1026 = vst [vmem:[#allocation11 + $0x130] sm:$0xff] %v1013
    %1027 = vst [vmem:[#allocation11 + $0x138] sm:$0xff] %v1016
    %1028 = vst [vmem:[#allocation11 + $0x140] sm:$0xff] %v1019
    %1029 = vst.msk [vmem:[#allocation11 + $0x148] sm:$0xff] %vm588, %v1022
    %v1030 = vlaneseq
    %v1031 = vshrl.u32 %v1030, 7
    %v1032 = vsub.s32 7, %v1031
    %v1033 = vrot.slane %v454, %v1032
    %v1034 = vlaneseq
    %v1035 = vshrl.u32 %v1034, 7
    %v1036 = vsub.s32 7, %v1035
    %v1037 = vrot.slane %v455, %v1036
    %v1038 = vlaneseq
    %v1039 = vshrl.u32 %v1038, 7
    %v1040 = vsub.s32 7, %v1039
    %v1041 = vrot.slane %v456, %v1040
    %v1042 = vlaneseq
    %v1043 = vshrl.u32 %v1042, 7
    %v1044 = vsub.s32 7, %v1043
    %v1045 = vrot.slane %v457, %v1044
    %v1046 = vlaneseq
    %v1047 = vshrl.u32 %v1046, 7
    %v1048 = vsub.s32 7, %v1047
    %v1049 = vrot.slane %v458, %v1048
    %v1050 = vlaneseq
    %v1051 = vshrl.u32 %v1050, 7
    %v1052 = vsub.s32 7, %v1051
    %v1053 = vrot.slane %v459, %v1052
    %v1054 = vlaneseq
    %v1055 = vshrl.u32 %v1054, 7
    %v1056 = vsub.s32 7, %v1055
    %v1057 = vrot.slane %v460, %v1056
    %vm1058 = vcmp.lt.s32.totalorder %v469, 18
    %vm1059 = vcmp.lt.s32.totalorder %v470, 18
    %vm1060 = vcmp.lt.s32.totalorder %v471, 18
    %vm1061 = vcmp.lt.s32.totalorder %v472, 18
    %v1062 = vsel %vm1058, %v945, %v1033
    %v1063 = vsel %vm1058, %v949, %v1037
    %v1064 = vsel %vm1058, %v953, %v1041
    %v1065 = vsel %vm1058, %v957, %v1045
    %v1066 = vsel %vm1058, %v961, %v1049
    %v1067 = vsel %vm1058, %v965, %v1053
    %v1068 = vsel %vm1058, %v969, %v1057
    %v1069 = vsel %vm1059, %v945, %v1033
    %v1070 = vsel %vm1059, %v949, %v1037
    %v1071 = vsel %vm1059, %v953, %v1041
    %v1072 = vsel %vm1059, %v957, %v1045
    %v1073 = vsel %vm1059, %v961, %v1049
    %v1074 = vsel %vm1059, %v965, %v1053
    %v1075 = vsel %vm1059, %v969, %v1057
    %v1076 = vsel %vm1060, %v945, %v1033
    %v1077 = vsel %vm1060, %v949, %v1037
    %v1078 = vsel %vm1060, %v953, %v1041
    %v1079 = vsel %vm1060, %v957, %v1045
    %v1080 = vsel %vm1060, %v961, %v1049
    %v1081 = vsel %vm1060, %v965, %v1053
    %v1082 = vsel %vm1060, %v969, %v1057
    %v1083 = vsel %vm1061, %v945, %v1033
    %v1084 = vsel %vm1061, %v949, %v1037
    %v1085 = vsel %vm1061, %v953, %v1041
    %v1086 = vsel %vm1061, %v957, %v1045
    %v1087 = vsel %vm1061, %v961, %v1049
    %v1088 = vsel %vm1061, %v965, %v1053
    %v1089 = vsel %vm1061, %v969, %v1057
    %v1090 = vpack.c.b16 %v1069, %v1062
    %v1091 = vpack.c.b16 %v1083, %v1076
    %v1092 = vpack.c.b8 %v1091, %v1090
    %v1093 = vpack.c.b16 %v1070, %v1063
    %v1094 = vpack.c.b16 %v1084, %v1077
    %v1095 = vpack.c.b8 %v1094, %v1093
    %v1096 = vpack.c.b16 %v1071, %v1064
    %v1097 = vpack.c.b16 %v1085, %v1078
    %v1098 = vpack.c.b8 %v1097, %v1096
    %v1099 = vpack.c.b16 %v1072, %v1065
    %v1100 = vpack.c.b16 %v1086, %v1079
    %v1101 = vpack.c.b8 %v1100, %v1099
    %v1102 = vpack.c.b16 %v1073, %v1066
    %v1103 = vpack.c.b16 %v1087, %v1080
    %v1104 = vpack.c.b8 %v1103, %v1102
    %v1105 = vpack.c.b16 %v1074, %v1067
    %v1106 = vpack.c.b16 %v1088, %v1081
    %v1107 = vpack.c.b8 %v1106, %v1105
    %v1108 = vpack.c.b16 %v1075, %v1068
    %v1109 = vpack.c.b16 %v1089, %v1082
    %v1110 = vpack.c.b8 %v1109, %v1108
    %1111 = vst [vmem:[#allocation11 + $0x150] sm:$0xff] %v1092
    %1112 = vst [vmem:[#allocation11 + $0x158] sm:$0xff] %v1095
    %1113 = vst [vmem:[#allocation11 + $0x160] sm:$0xff] %v1098
    %1114 = vst [vmem:[#allocation11 + $0x168] sm:$0xff] %v1101
    %1115 = vst [vmem:[#allocation11 + $0x170] sm:$0xff] %v1104
    %1116 = vst [vmem:[#allocation11 + $0x178] sm:$0xff] %v1107
    %1117 = vst.msk [vmem:[#allocation11 + $0x180] sm:$0xff] %vm588, %v1110
    %v1118 = vlaneseq
    %v1119 = vshrl.u32 %v1118, 7
    %v1120 = vsub.s32 0, %v1119
    %v1121 = vrot.slane %v461, %v1120
    %v1122 = vlaneseq
    %v1123 = vshrl.u32 %v1122, 7
    %v1124 = vsub.s32 0, %v1123
    %v1125 = vrot.slane %v462, %v1124
    %v1126 = vlaneseq
    %v1127 = vshrl.u32 %v1126, 7
    %v1128 = vsub.s32 0, %v1127
    %v1129 = vrot.slane %v463, %v1128
    %v1130 = vlaneseq
    %v1131 = vshrl.u32 %v1130, 7
    %v1132 = vsub.s32 0, %v1131
    %v1133 = vrot.slane %v464, %v1132
    %v1134 = vlaneseq
    %v1135 = vshrl.u32 %v1134, 7
    %v1136 = vsub.s32 0, %v1135
    %v1137 = vrot.slane %v465, %v1136
    %v1138 = vlaneseq
    %v1139 = vshrl.u32 %v1138, 7
    %v1140 = vsub.s32 0, %v1139
    %v1141 = vrot.slane %v466, %v1140
    %v1142 = vlaneseq
    %v1143 = vshrl.u32 %v1142, 7
    %v1144 = vsub.s32 0, %v1143
    %v1145 = vrot.slane %v467, %v1144
    %vm1146 = vcmp.lt.s32.totalorder %v469, 16
    %vm1147 = vcmp.lt.s32.totalorder %v470, 16
    %vm1148 = vcmp.lt.s32.totalorder %v471, 16
    %vm1149 = vcmp.lt.s32.totalorder %v472, 16
    %v1150 = vsel %vm1146, %v1033, %v1121
    %v1151 = vsel %vm1146, %v1037, %v1125
    %v1152 = vsel %vm1146, %v1041, %v1129
    %v1153 = vsel %vm1146, %v1045, %v1133
    %v1154 = vsel %vm1146, %v1049, %v1137
    %v1155 = vsel %vm1146, %v1053, %v1141
    %v1156 = vsel %vm1146, %v1057, %v1145
    %v1157 = vsel %vm1147, %v1033, %v1121
    %v1158 = vsel %vm1147, %v1037, %v1125
    %v1159 = vsel %vm1147, %v1041, %v1129
    %v1160 = vsel %vm1147, %v1045, %v1133
    %v1161 = vsel %vm1147, %v1049, %v1137
    %v1162 = vsel %vm1147, %v1053, %v1141
    %v1163 = vsel %vm1147, %v1057, %v1145
    %v1164 = vsel %vm1148, %v1033, %v1121
    %v1165 = vsel %vm1148, %v1037, %v1125
    %v1166 = vsel %vm1148, %v1041, %v1129
    %v1167 = vsel %vm1148, %v1045, %v1133
    %v1168 = vsel %vm1148, %v1049, %v1137
    %v1169 = vsel %vm1148, %v1053, %v1141
    %v1170 = vsel %vm1148, %v1057, %v1145
    %v1171 = vsel %vm1149, %v1033, %v1121
    %v1172 = vsel %vm1149, %v1037, %v1125
    %v1173 = vsel %vm1149, %v1041, %v1129
    %v1174 = vsel %vm1149, %v1045, %v1133
    %v1175 = vsel %vm1149, %v1049, %v1137
    %v1176 = vsel %vm1149, %v1053, %v1141
    %v1177 = vsel %vm1149, %v1057, %v1145
    %v1178 = vpack.c.b16 %v1157, %v1150
    %v1179 = vpack.c.b16 %v1171, %v1164
    %v1180 = vpack.c.b8 %v1179, %v1178
    %v1181 = vpack.c.b16 %v1158, %v1151
    %v1182 = vpack.c.b16 %v1172, %v1165
    %v1183 = vpack.c.b8 %v1182, %v1181
    %v1184 = vpack.c.b16 %v1159, %v1152
    %v1185 = vpack.c.b16 %v1173, %v1166
    %v1186 = vpack.c.b8 %v1185, %v1184
    %v1187 = vpack.c.b16 %v1160, %v1153
    %v1188 = vpack.c.b16 %v1174, %v1167
    %v1189 = vpack.c.b8 %v1188, %v1187
    %v1190 = vpack.c.b16 %v1161, %v1154
    %v1191 = vpack.c.b16 %v1175, %v1168
    %v1192 = vpack.c.b8 %v1191, %v1190
    %v1193 = vpack.c.b16 %v1162, %v1155
    %v1194 = vpack.c.b16 %v1176, %v1169
    %v1195 = vpack.c.b8 %v1194, %v1193
    %v1196 = vpack.c.b16 %v1163, %v1156
    %v1197 = vpack.c.b16 %v1177, %v1170
    %v1198 = vpack.c.b8 %v1197, %v1196
    %1199 = vst [vmem:[#allocation11 + $0x188] sm:$0xff] %v1180
    %1200 = vst [vmem:[#allocation11 + $0x190] sm:$0xff] %v1183
    %1201 = vst [vmem:[#allocation11 + $0x198] sm:$0xff] %v1186
    %1202 = vst [vmem:[#allocation11 + $0x1a0] sm:$0xff] %v1189
    %1203 = vst [vmem:[#allocation11 + $0x1a8] sm:$0xff] %v1192
    %1204 = vst [vmem:[#allocation11 + $0x1b0] sm:$0xff] %v1195
    %1205 = vst.msk [vmem:[#allocation11 + $0x1b8] sm:$0xff] %vm588, %v1198
    %v1206 = vlaneseq
    %v1207 = vshrl.u32 %v1206, 7
    %v1208 = vsub.s32 1, %v1207
    %v1209 = vrot.slane %v461, %v1208
    %v1210 = vlaneseq
    %v1211 = vshrl.u32 %v1210, 7
    %v1212 = vsub.s32 1, %v1211
    %v1213 = vrot.slane %v462, %v1212
    %v1214 = vlaneseq
    %v1215 = vshrl.u32 %v1214, 7
    %v1216 = vsub.s32 1, %v1215
    %v1217 = vrot.slane %v463, %v1216
    %v1218 = vlaneseq
    %v1219 = vshrl.u32 %v1218, 7
    %v1220 = vsub.s32 1, %v1219
    %v1221 = vrot.slane %v464, %v1220
    %v1222 = vlaneseq
    %v1223 = vshrl.u32 %v1222, 7
    %v1224 = vsub.s32 1, %v1223
    %v1225 = vrot.slane %v465, %v1224
    %v1226 = vlaneseq
    %v1227 = vshrl.u32 %v1226, 7
    %v1228 = vsub.s32 1, %v1227
    %v1229 = vrot.slane %v466, %v1228
    %v1230 = vlaneseq
    %v1231 = vshrl.u32 %v1230, 7
    %v1232 = vsub.s32 1, %v1231
    %v1233 = vrot.slane %v467, %v1232
    %vm1234 = vcmp.lt.s32.totalorder %v469, 14
    %vm1235 = vcmp.lt.s32.totalorder %v470, 14
    %vm1236 = vcmp.lt.s32.totalorder %v471, 14
    %vm1237 = vcmp.lt.s32.totalorder %v472, 14
    %v1238 = vsel %vm1234, %v1121, %v1209
    %v1239 = vsel %vm1234, %v1125, %v1213
    %v1240 = vsel %vm1234, %v1129, %v1217
    %v1241 = vsel %vm1234, %v1133, %v1221
    %v1242 = vsel %vm1234, %v1137, %v1225
    %v1243 = vsel %vm1234, %v1141, %v1229
    %v1244 = vsel %vm1234, %v1145, %v1233
    %v1245 = vsel %vm1235, %v1121, %v1209
    %v1246 = vsel %vm1235, %v1125, %v1213
    %v1247 = vsel %vm1235, %v1129, %v1217
    %v1248 = vsel %vm1235, %v1133, %v1221
    %v1249 = vsel %vm1235, %v1137, %v1225
    %v1250 = vsel %vm1235, %v1141, %v1229
    %v1251 = vsel %vm1235, %v1145, %v1233
    %v1252 = vsel %vm1236, %v1121, %v1209
    %v1253 = vsel %vm1236, %v1125, %v1213
    %v1254 = vsel %vm1236, %v1129, %v1217
    %v1255 = vsel %vm1236, %v1133, %v1221
    %v1256 = vsel %vm1236, %v1137, %v1225
    %v1257 = vsel %vm1236, %v1141, %v1229
    %v1258 = vsel %vm1236, %v1145, %v1233
    %v1259 = vsel %vm1237, %v1121, %v1209
    %v1260 = vsel %vm1237, %v1125, %v1213
    %v1261 = vsel %vm1237, %v1129, %v1217
    %v1262 = vsel %vm1237, %v1133, %v1221
    %v1263 = vsel %vm1237, %v1137, %v1225
    %v1264 = vsel %vm1237, %v1141, %v1229
    %v1265 = vsel %vm1237, %v1145, %v1233
    %v1266 = vpack.c.b16 %v1245, %v1238
    %v1267 = vpack.c.b16 %v1259, %v1252
    %v1268 = vpack.c.b8 %v1267, %v1266
    %v1269 = vpack.c.b16 %v1246, %v1239
    %v1270 = vpack.c.b16 %v1260, %v1253
    %v1271 = vpack.c.b8 %v1270, %v1269
    %v1272 = vpack.c.b16 %v1247, %v1240
    %v1273 = vpack.c.b16 %v1261, %v1254
    %v1274 = vpack.c.b8 %v1273, %v1272
    %v1275 = vpack.c.b16 %v1248, %v1241
    %v1276 = vpack.c.b16 %v1262, %v1255
    %v1277 = vpack.c.b8 %v1276, %v1275
    %v1278 = vpack.c.b16 %v1249, %v1242
    %v1279 = vpack.c.b16 %v1263, %v1256
    %v1280 = vpack.c.b8 %v1279, %v1278
    %v1281 = vpack.c.b16 %v1250, %v1243
    %v1282 = vpack.c.b16 %v1264, %v1257
    %v1283 = vpack.c.b8 %v1282, %v1281
    %v1284 = vpack.c.b16 %v1251, %v1244
    %v1285 = vpack.c.b16 %v1265, %v1258
    %v1286 = vpack.c.b8 %v1285, %v1284
    %1287 = vst [vmem:[#allocation11 + $0x1c0] sm:$0xff] %v1268
    %1288 = vst [vmem:[#allocation11 + $0x1c8] sm:$0xff] %v1271
    %1289 = vst [vmem:[#allocation11 + $0x1d0] sm:$0xff] %v1274
    %1290 = vst [vmem:[#allocation11 + $0x1d8] sm:$0xff] %v1277
    %1291 = vst [vmem:[#allocation11 + $0x1e0] sm:$0xff] %v1280
    %1292 = vst [vmem:[#allocation11 + $0x1e8] sm:$0xff] %v1283
    %1293 = vst.msk [vmem:[#allocation11 + $0x1f0] sm:$0xff] %vm588, %v1286
    %v1294 = vlaneseq
    %v1295 = vshrl.u32 %v1294, 7
    %v1296 = vsub.s32 2, %v1295
    %v1297 = vrot.slane %v461, %v1296
    %v1298 = vlaneseq
    %v1299 = vshrl.u32 %v1298, 7
    %v1300 = vsub.s32 2, %v1299
    %v1301 = vrot.slane %v462, %v1300
    %v1302 = vlaneseq
    %v1303 = vshrl.u32 %v1302, 7
    %v1304 = vsub.s32 2, %v1303
    %v1305 = vrot.slane %v463, %v1304
    %v1306 = vlaneseq
    %v1307 = vshrl.u32 %v1306, 7
    %v1308 = vsub.s32 2, %v1307
    %v1309 = vrot.slane %v464, %v1308
    %v1310 = vlaneseq
    %v1311 = vshrl.u32 %v1310, 7
    %v1312 = vsub.s32 2, %v1311
    %v1313 = vrot.slane %v465, %v1312
    %v1314 = vlaneseq
    %v1315 = vshrl.u32 %v1314, 7
    %v1316 = vsub.s32 2, %v1315
    %v1317 = vrot.slane %v466, %v1316
    %v1318 = vlaneseq
    %v1319 = vshrl.u32 %v1318, 7
    %v1320 = vsub.s32 2, %v1319
    %v1321 = vrot.slane %v467, %v1320
    %vm1322 = vcmp.lt.s32.totalorder %v469, 12
    %vm1323 = vcmp.lt.s32.totalorder %v470, 12
    %vm1324 = vcmp.lt.s32.totalorder %v471, 12
    %vm1325 = vcmp.lt.s32.totalorder %v472, 12
    %v1326 = vsel %vm1322, %v1209, %v1297
    %v1327 = vsel %vm1322, %v1213, %v1301
    %v1328 = vsel %vm1322, %v1217, %v1305
    %v1329 = vsel %vm1322, %v1221, %v1309
    %v1330 = vsel %vm1322, %v1225, %v1313
    %v1331 = vsel %vm1322, %v1229, %v1317
    %v1332 = vsel %vm1322, %v1233, %v1321
    %v1333 = vsel %vm1323, %v1209, %v1297
    %v1334 = vsel %vm1323, %v1213, %v1301
    %v1335 = vsel %vm1323, %v1217, %v1305
    %v1336 = vsel %vm1323, %v1221, %v1309
    %v1337 = vsel %vm1323, %v1225, %v1313
    %v1338 = vsel %vm1323, %v1229, %v1317
    %v1339 = vsel %vm1323, %v1233, %v1321
    %v1340 = vsel %vm1324, %v1209, %v1297
    %v1341 = vsel %vm1324, %v1213, %v1301
    %v1342 = vsel %vm1324, %v1217, %v1305
    %v1343 = vsel %vm1324, %v1221, %v1309
    %v1344 = vsel %vm1324, %v1225, %v1313
    %v1345 = vsel %vm1324, %v1229, %v1317
    %v1346 = vsel %vm1324, %v1233, %v1321
    %v1347 = vsel %vm1325, %v1209, %v1297
    %v1348 = vsel %vm1325, %v1213, %v1301
    %v1349 = vsel %vm1325, %v1217, %v1305
    %v1350 = vsel %vm1325, %v1221, %v1309
    %v1351 = vsel %vm1325, %v1225, %v1313
    %v1352 = vsel %vm1325, %v1229, %v1317
    %v1353 = vsel %vm1325, %v1233, %v1321
    %v1354 = vpack.c.b16 %v1333, %v1326
    %v1355 = vpack.c.b16 %v1347, %v1340
    %v1356 = vpack.c.b8 %v1355, %v1354
    %v1357 = vpack.c.b16 %v1334, %v1327
    %v1358 = vpack.c.b16 %v1348, %v1341
    %v1359 = vpack.c.b8 %v1358, %v1357
    %v1360 = vpack.c.b16 %v1335, %v1328
    %v1361 = vpack.c.b16 %v1349, %v1342
    %v1362 = vpack.c.b8 %v1361, %v1360
    %v1363 = vpack.c.b16 %v1336, %v1329
    %v1364 = vpack.c.b16 %v1350, %v1343
    %v1365 = vpack.c.b8 %v1364, %v1363
    %v1366 = vpack.c.b16 %v1337, %v1330
    %v1367 = vpack.c.b16 %v1351, %v1344
    %v1368 = vpack.c.b8 %v1367, %v1366
    %v1369 = vpack.c.b16 %v1338, %v1331
    %v1370 = vpack.c.b16 %v1352, %v1345
    %v1371 = vpack.c.b8 %v1370, %v1369
    %v1372 = vpack.c.b16 %v1339, %v1332
    %v1373 = vpack.c.b16 %v1353, %v1346
    %v1374 = vpack.c.b8 %v1373, %v1372
    %1375 = vst [vmem:[#allocation11 + $0x1f8] sm:$0xff] %v1356
    %1376 = vst [vmem:[#allocation11 + $0x200] sm:$0xff] %v1359
    %1377 = vst [vmem:[#allocation11 + $0x208] sm:$0xff] %v1362
    %1378 = vst [vmem:[#allocation11 + $0x210] sm:$0xff] %v1365
    %1379 = vst [vmem:[#allocation11 + $0x218] sm:$0xff] %v1368
    %1380 = vst [vmem:[#allocation11 + $0x220] sm:$0xff] %v1371
    %1381 = vst.msk [vmem:[#allocation11 + $0x228] sm:$0xff] %vm588, %v1374
    %v1382 = vlaneseq
    %v1383 = vshrl.u32 %v1382, 7
    %v1384 = vsub.s32 3, %v1383
    %v1385 = vrot.slane %v461, %v1384
    %v1386 = vlaneseq
    %v1387 = vshrl.u32 %v1386, 7
    %v1388 = vsub.s32 3, %v1387
    %v1389 = vrot.slane %v462, %v1388
    %v1390 = vlaneseq
    %v1391 = vshrl.u32 %v1390, 7
    %v1392 = vsub.s32 3, %v1391
    %v1393 = vrot.slane %v463, %v1392
    %v1394 = vlaneseq
    %v1395 = vshrl.u32 %v1394, 7
    %v1396 = vsub.s32 3, %v1395
    %v1397 = vrot.slane %v464, %v1396
    %v1398 = vlaneseq
    %v1399 = vshrl.u32 %v1398, 7
    %v1400 = vsub.s32 3, %v1399
    %v1401 = vrot.slane %v465, %v1400
    %v1402 = vlaneseq
    %v1403 = vshrl.u32 %v1402, 7
    %v1404 = vsub.s32 3, %v1403
    %v1405 = vrot.slane %v466, %v1404
    %v1406 = vlaneseq
    %v1407 = vshrl.u32 %v1406, 7
    %v1408 = vsub.s32 3, %v1407
    %v1409 = vrot.slane %v467, %v1408
    %vm1410 = vcmp.lt.s32.totalorder %v469, 10
    %vm1411 = vcmp.lt.s32.totalorder %v470, 10
    %vm1412 = vcmp.lt.s32.totalorder %v471, 10
    %vm1413 = vcmp.lt.s32.totalorder %v472, 10
    %v1414 = vsel %vm1410, %v1297, %v1385
    %v1415 = vsel %vm1410, %v1301, %v1389
    %v1416 = vsel %vm1410, %v1305, %v1393
    %v1417 = vsel %vm1410, %v1309, %v1397
    %v1418 = vsel %vm1410, %v1313, %v1401
    %v1419 = vsel %vm1410, %v1317, %v1405
    %v1420 = vsel %vm1410, %v1321, %v1409
    %v1421 = vsel %vm1411, %v1297, %v1385
    %v1422 = vsel %vm1411, %v1301, %v1389
    %v1423 = vsel %vm1411, %v1305, %v1393
    %v1424 = vsel %vm1411, %v1309, %v1397
    %v1425 = vsel %vm1411, %v1313, %v1401
    %v1426 = vsel %vm1411, %v1317, %v1405
    %v1427 = vsel %vm1411, %v1321, %v1409
    %v1428 = vsel %vm1412, %v1297, %v1385
    %v1429 = vsel %vm1412, %v1301, %v1389
    %v1430 = vsel %vm1412, %v1305, %v1393
    %v1431 = vsel %vm1412, %v1309, %v1397
    %v1432 = vsel %vm1412, %v1313, %v1401
    %v1433 = vsel %vm1412, %v1317, %v1405
    %v1434 = vsel %vm1412, %v1321, %v1409
    %v1435 = vsel %vm1413, %v1297, %v1385
    %v1436 = vsel %vm1413, %v1301, %v1389
    %v1437 = vsel %vm1413, %v1305, %v1393
    %v1438 = vsel %vm1413, %v1309, %v1397
    %v1439 = vsel %vm1413, %v1313, %v1401
    %v1440 = vsel %vm1413, %v1317, %v1405
    %v1441 = vsel %vm1413, %v1321, %v1409
    %v1442 = vpack.c.b16 %v1421, %v1414
    %v1443 = vpack.c.b16 %v1435, %v1428
    %v1444 = vpack.c.b8 %v1443, %v1442
    %v1445 = vpack.c.b16 %v1422, %v1415
    %v1446 = vpack.c.b16 %v1436, %v1429
    %v1447 = vpack.c.b8 %v1446, %v1445
    %v1448 = vpack.c.b16 %v1423, %v1416
    %v1449 = vpack.c.b16 %v1437, %v1430
    %v1450 = vpack.c.b8 %v1449, %v1448
    %v1451 = vpack.c.b16 %v1424, %v1417
    %v1452 = vpack.c.b16 %v1438, %v1431
    %v1453 = vpack.c.b8 %v1452, %v1451
    %v1454 = vpack.c.b16 %v1425, %v1418
    %v1455 = vpack.c.b16 %v1439, %v1432
    %v1456 = vpack.c.b8 %v1455, %v1454
    %v1457 = vpack.c.b16 %v1426, %v1419
    %v1458 = vpack.c.b16 %v1440, %v1433
    %v1459 = vpack.c.b8 %v1458, %v1457
    %v1460 = vpack.c.b16 %v1427, %v1420
    %v1461 = vpack.c.b16 %v1441, %v1434
    %v1462 = vpack.c.b8 %v1461, %v1460
    %1463 = vst [vmem:[#allocation11 + $0x230] sm:$0xff] %v1444
    %1464 = vst [vmem:[#allocation11 + $0x238] sm:$0xff] %v1447
    %1465 = vst [vmem:[#allocation11 + $0x240] sm:$0xff] %v1450
    %1466 = vst [vmem:[#allocation11 + $0x248] sm:$0xff] %v1453
    %1467 = vst [vmem:[#allocation11 + $0x250] sm:$0xff] %v1456
    %1468 = vst [vmem:[#allocation11 + $0x258] sm:$0xff] %v1459
    %1469 = vst.msk [vmem:[#allocation11 + $0x260] sm:$0xff] %vm588, %v1462
    %v1470 = vlaneseq
    %v1471 = vshrl.u32 %v1470, 7
    %v1472 = vsub.s32 4, %v1471
    %v1473 = vrot.slane %v461, %v1472
    %v1474 = vlaneseq
    %v1475 = vshrl.u32 %v1474, 7
    %v1476 = vsub.s32 4, %v1475
    %v1477 = vrot.slane %v462, %v1476
    %v1478 = vlaneseq
    %v1479 = vshrl.u32 %v1478, 7
    %v1480 = vsub.s32 4, %v1479
    %v1481 = vrot.slane %v463, %v1480
    %v1482 = vlaneseq
    %v1483 = vshrl.u32 %v1482, 7
    %v1484 = vsub.s32 4, %v1483
    %v1485 = vrot.slane %v464, %v1484
    %v1486 = vlaneseq
    %v1487 = vshrl.u32 %v1486, 7
    %v1488 = vsub.s32 4, %v1487
    %v1489 = vrot.slane %v465, %v1488
    %v1490 = vlaneseq
    %v1491 = vshrl.u32 %v1490, 7
    %v1492 = vsub.s32 4, %v1491
    %v1493 = vrot.slane %v466, %v1492
    %v1494 = vlaneseq
    %v1495 = vshrl.u32 %v1494, 7
    %v1496 = vsub.s32 4, %v1495
    %v1497 = vrot.slane %v467, %v1496
    %vm1498 = vcmp.lt.s32.totalorder %v469, 8
    %vm1499 = vcmp.lt.s32.totalorder %v470, 8
    %vm1500 = vcmp.lt.s32.totalorder %v471, 8
    %vm1501 = vcmp.lt.s32.totalorder %v472, 8
    %v1502 = vsel %vm1498, %v1385, %v1473
    %v1503 = vsel %vm1498, %v1389, %v1477
    %v1504 = vsel %vm1498, %v1393, %v1481
    %v1505 = vsel %vm1498, %v1397, %v1485
    %v1506 = vsel %vm1498, %v1401, %v1489
    %v1507 = vsel %vm1498, %v1405, %v1493
    %v1508 = vsel %vm1498, %v1409, %v1497
    %v1509 = vsel %vm1499, %v1385, %v1473
    %v1510 = vsel %vm1499, %v1389, %v1477
    %v1511 = vsel %vm1499, %v1393, %v1481
    %v1512 = vsel %vm1499, %v1397, %v1485
    %v1513 = vsel %vm1499, %v1401, %v1489
    %v1514 = vsel %vm1499, %v1405, %v1493
    %v1515 = vsel %vm1499, %v1409, %v1497
    %v1516 = vsel %vm1500, %v1385, %v1473
    %v1517 = vsel %vm1500, %v1389, %v1477
    %v1518 = vsel %vm1500, %v1393, %v1481
    %v1519 = vsel %vm1500, %v1397, %v1485
    %v1520 = vsel %vm1500, %v1401, %v1489
    %v1521 = vsel %vm1500, %v1405, %v1493
    %v1522 = vsel %vm1500, %v1409, %v1497
    %v1523 = vsel %vm1501, %v1385, %v1473
    %v1524 = vsel %vm1501, %v1389, %v1477
    %v1525 = vsel %vm1501, %v1393, %v1481
    %v1526 = vsel %vm1501, %v1397, %v1485
    %v1527 = vsel %vm1501, %v1401, %v1489
    %v1528 = vsel %vm1501, %v1405, %v1493
    %v1529 = vsel %vm1501, %v1409, %v1497
    %v1530 = vpack.c.b16 %v1509, %v1502
    %v1531 = vpack.c.b16 %v1523, %v1516
    %v1532 = vpack.c.b8 %v1531, %v1530
    %v1533 = vpack.c.b16 %v1510, %v1503
    %v1534 = vpack.c.b16 %v1524, %v1517
    %v1535 = vpack.c.b8 %v1534, %v1533
    %v1536 = vpack.c.b16 %v1511, %v1504
    %v1537 = vpack.c.b16 %v1525, %v1518
    %v1538 = vpack.c.b8 %v1537, %v1536
    %v1539 = vpack.c.b16 %v1512, %v1505
    %v1540 = vpack.c.b16 %v1526, %v1519
    %v1541 = vpack.c.b8 %v1540, %v1539
    %v1542 = vpack.c.b16 %v1513, %v1506
    %v1543 = vpack.c.b16 %v1527, %v1520
    %v1544 = vpack.c.b8 %v1543, %v1542
    %v1545 = vpack.c.b16 %v1514, %v1507
    %v1546 = vpack.c.b16 %v1528, %v1521
    %v1547 = vpack.c.b8 %v1546, %v1545
    %v1548 = vpack.c.b16 %v1515, %v1508
    %v1549 = vpack.c.b16 %v1529, %v1522
    %v1550 = vpack.c.b8 %v1549, %v1548
    %1551 = vst [vmem:[#allocation11 + $0x268] sm:$0xff] %v1532
    %1552 = vst [vmem:[#allocation11 + $0x270] sm:$0xff] %v1535
    %1553 = vst [vmem:[#allocation11 + $0x278] sm:$0xff] %v1538
    %1554 = vst [vmem:[#allocation11 + $0x280] sm:$0xff] %v1541
    %1555 = vst [vmem:[#allocation11 + $0x288] sm:$0xff] %v1544
    %1556 = vst [vmem:[#allocation11 + $0x290] sm:$0xff] %v1547
    %1557 = vst.msk [vmem:[#allocation11 + $0x298] sm:$0xff] %vm588, %v1550
    %v1558 = vlaneseq
    %v1559 = vshrl.u32 %v1558, 7
    %v1560 = vsub.s32 5, %v1559
    %v1561 = vrot.slane %v461, %v1560
    %v1562 = vlaneseq
    %v1563 = vshrl.u32 %v1562, 7
    %v1564 = vsub.s32 5, %v1563
    %v1565 = vrot.slane %v462, %v1564
    %v1566 = vlaneseq
    %v1567 = vshrl.u32 %v1566, 7
    %v1568 = vsub.s32 5, %v1567
    %v1569 = vrot.slane %v463, %v1568
    %v1570 = vlaneseq
    %v1571 = vshrl.u32 %v1570, 7
    %v1572 = vsub.s32 5, %v1571
    %v1573 = vrot.slane %v464, %v1572
    %v1574 = vlaneseq
    %v1575 = vshrl.u32 %v1574, 7
    %v1576 = vsub.s32 5, %v1575
    %v1577 = vrot.slane %v465, %v1576
    %v1578 = vlaneseq
    %v1579 = vshrl.u32 %v1578, 7
    %v1580 = vsub.s32 5, %v1579
    %v1581 = vrot.slane %v466, %v1580
    %v1582 = vlaneseq
    %v1583 = vshrl.u32 %v1582, 7
    %v1584 = vsub.s32 5, %v1583
    %v1585 = vrot.slane %v467, %v1584
    %vm1586 = vcmp.lt.s32.totalorder %v469, 6
    %vm1587 = vcmp.lt.s32.totalorder %v470, 6
    %vm1588 = vcmp.lt.s32.totalorder %v471, 6
    %vm1589 = vcmp.lt.s32.totalorder %v472, 6
    %v1590 = vsel %vm1586, %v1473, %v1561
    %v1591 = vsel %vm1586, %v1477, %v1565
    %v1592 = vsel %vm1586, %v1481, %v1569
    %v1593 = vsel %vm1586, %v1485, %v1573
    %v1594 = vsel %vm1586, %v1489, %v1577
    %v1595 = vsel %vm1586, %v1493, %v1581
    %v1596 = vsel %vm1586, %v1497, %v1585
    %v1597 = vsel %vm1587, %v1473, %v1561
    %v1598 = vsel %vm1587, %v1477, %v1565
    %v1599 = vsel %vm1587, %v1481, %v1569
    %v1600 = vsel %vm1587, %v1485, %v1573
    %v1601 = vsel %vm1587, %v1489, %v1577
    %v1602 = vsel %vm1587, %v1493, %v1581
    %v1603 = vsel %vm1587, %v1497, %v1585
    %v1604 = vsel %vm1588, %v1473, %v1561
    %v1605 = vsel %vm1588, %v1477, %v1565
    %v1606 = vsel %vm1588, %v1481, %v1569
    %v1607 = vsel %vm1588, %v1485, %v1573
    %v1608 = vsel %vm1588, %v1489, %v1577
    %v1609 = vsel %vm1588, %v1493, %v1581
    %v1610 = vsel %vm1588, %v1497, %v1585
    %v1611 = vsel %vm1589, %v1473, %v1561
    %v1612 = vsel %vm1589, %v1477, %v1565
    %v1613 = vsel %vm1589, %v1481, %v1569
    %v1614 = vsel %vm1589, %v1485, %v1573
    %v1615 = vsel %vm1589, %v1489, %v1577
    %v1616 = vsel %vm1589, %v1493, %v1581
    %v1617 = vsel %vm1589, %v1497, %v1585
    %v1618 = vpack.c.b16 %v1597, %v1590
    %v1619 = vpack.c.b16 %v1611, %v1604
    %v1620 = vpack.c.b8 %v1619, %v1618
    %v1621 = vpack.c.b16 %v1598, %v1591
    %v1622 = vpack.c.b16 %v1612, %v1605
    %v1623 = vpack.c.b8 %v1622, %v1621
    %v1624 = vpack.c.b16 %v1599, %v1592
    %v1625 = vpack.c.b16 %v1613, %v1606
    %v1626 = vpack.c.b8 %v1625, %v1624
    %v1627 = vpack.c.b16 %v1600, %v1593
    %v1628 = vpack.c.b16 %v1614, %v1607
    %v1629 = vpack.c.b8 %v1628, %v1627
    %v1630 = vpack.c.b16 %v1601, %v1594
    %v1631 = vpack.c.b16 %v1615, %v1608
    %v1632 = vpack.c.b8 %v1631, %v1630
    %v1633 = vpack.c.b16 %v1602, %v1595
    %v1634 = vpack.c.b16 %v1616, %v1609
    %v1635 = vpack.c.b8 %v1634, %v1633
    %v1636 = vpack.c.b16 %v1603, %v1596
    %v1637 = vpack.c.b16 %v1617, %v1610
    %v1638 = vpack.c.b8 %v1637, %v1636
    %1639 = vst [vmem:[#allocation11 + $0x2a0] sm:$0xff] %v1620
    %1640 = vst [vmem:[#allocation11 + $0x2a8] sm:$0xff] %v1623
    %1641 = vst [vmem:[#allocation11 + $0x2b0] sm:$0xff] %v1626
    %1642 = vst [vmem:[#allocation11 + $0x2b8] sm:$0xff] %v1629
    %1643 = vst [vmem:[#allocation11 + $0x2c0] sm:$0xff] %v1632
    %1644 = vst [vmem:[#allocation11 + $0x2c8] sm:$0xff] %v1635
    %1645 = vst.msk [vmem:[#allocation11 + $0x2d0] sm:$0xff] %vm588, %v1638
    %v1646 = vlaneseq
    %v1647 = vshrl.u32 %v1646, 7
    %v1648 = vsub.s32 6, %v1647
    %v1649 = vrot.slane %v461, %v1648
    %v1650 = vlaneseq
    %v1651 = vshrl.u32 %v1650, 7
    %v1652 = vsub.s32 6, %v1651
    %v1653 = vrot.slane %v462, %v1652
    %v1654 = vlaneseq
    %v1655 = vshrl.u32 %v1654, 7
    %v1656 = vsub.s32 6, %v1655
    %v1657 = vrot.slane %v463, %v1656
    %v1658 = vlaneseq
    %v1659 = vshrl.u32 %v1658, 7
    %v1660 = vsub.s32 6, %v1659
    %v1661 = vrot.slane %v464, %v1660
    %v1662 = vlaneseq
    %v1663 = vshrl.u32 %v1662, 7
    %v1664 = vsub.s32 6, %v1663
    %v1665 = vrot.slane %v465, %v1664
    %v1666 = vlaneseq
    %v1667 = vshrl.u32 %v1666, 7
    %v1668 = vsub.s32 6, %v1667
    %v1669 = vrot.slane %v466, %v1668
    %v1670 = vlaneseq
    %v1671 = vshrl.u32 %v1670, 7
    %v1672 = vsub.s32 6, %v1671
    %v1673 = vrot.slane %v467, %v1672
    %vm1674 = vcmp.lt.s32.totalorder %v469, 4
    %vm1675 = vcmp.lt.s32.totalorder %v470, 4
    %vm1676 = vcmp.lt.s32.totalorder %v471, 4
    %vm1677 = vcmp.lt.s32.totalorder %v472, 4
    %v1678 = vsel %vm1674, %v1561, %v1649
    %v1679 = vsel %vm1674, %v1565, %v1653
    %v1680 = vsel %vm1674, %v1569, %v1657
    %v1681 = vsel %vm1674, %v1573, %v1661
    %v1682 = vsel %vm1674, %v1577, %v1665
    %v1683 = vsel %vm1674, %v1581, %v1669
    %v1684 = vsel %vm1674, %v1585, %v1673
    %v1685 = vsel %vm1675, %v1561, %v1649
    %v1686 = vsel %vm1675, %v1565, %v1653
    %v1687 = vsel %vm1675, %v1569, %v1657
    %v1688 = vsel %vm1675, %v1573, %v1661
    %v1689 = vsel %vm1675, %v1577, %v1665
    %v1690 = vsel %vm1675, %v1581, %v1669
    %v1691 = vsel %vm1675, %v1585, %v1673
    %v1692 = vsel %vm1676, %v1561, %v1649
    %v1693 = vsel %vm1676, %v1565, %v1653
    %v1694 = vsel %vm1676, %v1569, %v1657
    %v1695 = vsel %vm1676, %v1573, %v1661
    %v1696 = vsel %vm1676, %v1577, %v1665
    %v1697 = vsel %vm1676, %v1581, %v1669
    %v1698 = vsel %vm1676, %v1585, %v1673
    %v1699 = vsel %vm1677, %v1561, %v1649
    %v1700 = vsel %vm1677, %v1565, %v1653
    %v1701 = vsel %vm1677, %v1569, %v1657
    %v1702 = vsel %vm1677, %v1573, %v1661
    %v1703 = vsel %vm1677, %v1577, %v1665
    %v1704 = vsel %vm1677, %v1581, %v1669
    %v1705 = vsel %vm1677, %v1585, %v1673
    %v1706 = vpack.c.b16 %v1685, %v1678
    %v1707 = vpack.c.b16 %v1699, %v1692
    %v1708 = vpack.c.b8 %v1707, %v1706
    %v1709 = vpack.c.b16 %v1686, %v1679
    %v1710 = vpack.c.b16 %v1700, %v1693
    %v1711 = vpack.c.b8 %v1710, %v1709
    %v1712 = vpack.c.b16 %v1687, %v1680
    %v1713 = vpack.c.b16 %v1701, %v1694
    %v1714 = vpack.c.b8 %v1713, %v1712
    %v1715 = vpack.c.b16 %v1688, %v1681
    %v1716 = vpack.c.b16 %v1702, %v1695
    %v1717 = vpack.c.b8 %v1716, %v1715
    %v1718 = vpack.c.b16 %v1689, %v1682
    %v1719 = vpack.c.b16 %v1703, %v1696
    %v1720 = vpack.c.b8 %v1719, %v1718
    %v1721 = vpack.c.b16 %v1690, %v1683
    %v1722 = vpack.c.b16 %v1704, %v1697
    %v1723 = vpack.c.b8 %v1722, %v1721
    %v1724 = vpack.c.b16 %v1691, %v1684
    %v1725 = vpack.c.b16 %v1705, %v1698
    %v1726 = vpack.c.b8 %v1725, %v1724
    %1727 = vst [vmem:[#allocation11 + $0x2d8] sm:$0xff] %v1708
    %1728 = vst [vmem:[#allocation11 + $0x2e0] sm:$0xff] %v1711
    %1729 = vst [vmem:[#allocation11 + $0x2e8] sm:$0xff] %v1714
    %1730 = vst [vmem:[#allocation11 + $0x2f0] sm:$0xff] %v1717
    %1731 = vst [vmem:[#allocation11 + $0x2f8] sm:$0xff] %v1720
    %1732 = vst [vmem:[#allocation11 + $0x300] sm:$0xff] %v1723
    %1733 = vst.msk [vmem:[#allocation11 + $0x308] sm:$0xff] %vm588, %v1726
    %v1734 = vlaneseq
    %v1735 = vshrl.u32 %v1734, 7
    %v1736 = vsub.s32 7, %v1735
    %v1737 = vrot.slane %v461, %v1736
    %v1738 = vlaneseq
    %v1739 = vshrl.u32 %v1738, 7
    %v1740 = vsub.s32 7, %v1739
    %v1741 = vrot.slane %v462, %v1740
    %v1742 = vlaneseq
    %v1743 = vshrl.u32 %v1742, 7
    %v1744 = vsub.s32 7, %v1743
    %v1745 = vrot.slane %v463, %v1744
    %v1746 = vlaneseq
    %v1747 = vshrl.u32 %v1746, 7
    %v1748 = vsub.s32 7, %v1747
    %v1749 = vrot.slane %v464, %v1748
    %v1750 = vlaneseq
    %v1751 = vshrl.u32 %v1750, 7
    %v1752 = vsub.s32 7, %v1751
    %v1753 = vrot.slane %v465, %v1752
    %v1754 = vlaneseq
    %v1755 = vshrl.u32 %v1754, 7
    %v1756 = vsub.s32 7, %v1755
    %v1757 = vrot.slane %v466, %v1756
    %v1758 = vlaneseq
    %v1759 = vshrl.u32 %v1758, 7
    %v1760 = vsub.s32 7, %v1759
    %v1761 = vrot.slane %v467, %v1760
    %vm1762 = vcmp.lt.s32.totalorder %v469, 2
    %vm1763 = vcmp.lt.s32.totalorder %v470, 2
    %vm1764 = vcmp.lt.s32.totalorder %v471, 2
    %vm1765 = vcmp.lt.s32.totalorder %v472, 2
    %v1766 = vsel %vm1762, %v1649, %v1737
    %v1767 = vsel %vm1762, %v1653, %v1741
    %v1768 = vsel %vm1762, %v1657, %v1745
    %v1769 = vsel %vm1762, %v1661, %v1749
    %v1770 = vsel %vm1762, %v1665, %v1753
    %v1771 = vsel %vm1762, %v1669, %v1757
    %v1772 = vsel %vm1762, %v1673, %v1761
    %v1773 = vsel %vm1763, %v1649, %v1737
    %v1774 = vsel %vm1763, %v1653, %v1741
    %v1775 = vsel %vm1763, %v1657, %v1745
    %v1776 = vsel %vm1763, %v1661, %v1749
    %v1777 = vsel %vm1763, %v1665, %v1753
    %v1778 = vsel %vm1763, %v1669, %v1757
    %v1779 = vsel %vm1763, %v1673, %v1761
    %v1780 = vsel %vm1764, %v1649, %v1737
    %v1781 = vsel %vm1764, %v1653, %v1741
    %v1782 = vsel %vm1764, %v1657, %v1745
    %v1783 = vsel %vm1764, %v1661, %v1749
    %v1784 = vsel %vm1764, %v1665, %v1753
    %v1785 = vsel %vm1764, %v1669, %v1757
    %v1786 = vsel %vm1764, %v1673, %v1761
    %v1787 = vsel %vm1765, %v1649, %v1737
    %v1788 = vsel %vm1765, %v1653, %v1741
    %v1789 = vsel %vm1765, %v1657, %v1745
    %v1790 = vsel %vm1765, %v1661, %v1749
    %v1791 = vsel %vm1765, %v1665, %v1753
    %v1792 = vsel %vm1765, %v1669, %v1757
    %v1793 = vsel %vm1765, %v1673, %v1761
    %v1794 = vpack.c.b16 %v1773, %v1766
    %v1795 = vpack.c.b16 %v1787, %v1780
    %v1796 = vpack.c.b8 %v1795, %v1794
    %v1797 = vpack.c.b16 %v1774, %v1767
    %v1798 = vpack.c.b16 %v1788, %v1781
    %v1799 = vpack.c.b8 %v1798, %v1797
    %v1800 = vpack.c.b16 %v1775, %v1768
    %v1801 = vpack.c.b16 %v1789, %v1782
    %v1802 = vpack.c.b8 %v1801, %v1800
    %v1803 = vpack.c.b16 %v1776, %v1769
    %v1804 = vpack.c.b16 %v1790, %v1783
    %v1805 = vpack.c.b8 %v1804, %v1803
    %v1806 = vpack.c.b16 %v1777, %v1770
    %v1807 = vpack.c.b16 %v1791, %v1784
    %v1808 = vpack.c.b8 %v1807, %v1806
    %v1809 = vpack.c.b16 %v1778, %v1771
    %v1810 = vpack.c.b16 %v1792, %v1785
    %v1811 = vpack.c.b8 %v1810, %v1809
    %v1812 = vpack.c.b16 %v1779, %v1772
    %v1813 = vpack.c.b16 %v1793, %v1786
    %v1814 = vpack.c.b8 %v1813, %v1812
    %1815 = vst [vmem:[#allocation11 + $0x310] sm:$0xff] %v1796
    %1816 = vst [vmem:[#allocation11 + $0x318] sm:$0xff] %v1799
    %1817 = vst [vmem:[#allocation11 + $0x320] sm:$0xff] %v1802
    %1818 = vst [vmem:[#allocation11 + $0x328] sm:$0xff] %v1805
    %1819 = vst [vmem:[#allocation11 + $0x330] sm:$0xff] %v1808
    %1820 = vst [vmem:[#allocation11 + $0x338] sm:$0xff] %v1811
    %1821 = vst.msk [vmem:[#allocation11 + $0x340] sm:$0xff] %vm588, %v1814
    // Predicated region
    $region34: #{tpu_custom_call.1} parent=1 // pred_check
      _
    $region35: #{tpu_custom_call.1} parent=1 // pred_check_branch
      %1823 = sbr.rel (0) target = $region37
    $region36: #{tpu_custom_call.1} parent=1 // pred_region
      %s1825 = ssub.s32 13440, 13440
      %1826 = vsyncadd [#allocation4], %s1825
      %s1827 = sshll.u32 [#allocation11], 4
      %s1828 = int_to_ptr.vmem [resolvable:$true] %s1827
      %1833 = dma.vmem_to_hbm [thread:$0]  %s1828, 13440, %s4, [#allocation4], 896, 896, 56
    $region37: #{tpu_custom_call.1} parent=1 // pred_fallthru
      _
    // Predicated region
    $region38: #{tpu_custom_call.1} parent=1 // pred_check
      _
    $region39: #{tpu_custom_call.1} parent=1 // pred_check_branch
      %1835 = sbr.rel (0) target = $region41
    $region40: #{tpu_custom_call.1} parent=1 // pred_region
      %1836 = dma.done [#allocation4], 13440
    $region41: #{tpu_custom_call.1} parent=1 // pred_fallthru
      _
    %1837 = vsyncpa [#allocation3], 1
    %1838 = vsyncpa [#allocation10], 1
    %1839 = vsyncpa [#allocation4], 1
    %1840 = vsyncpa [#allocation5], 1
    %1841 = vsyncpa [#allocation8], 1

</llo_original>
